<compile_context>
chip_gen: v7x
topology: tpu7x:2x2x1
jax: 0.10.0
libtpu: 0.0.40
codegen_flags: <defaults>
</compile_context>

<pallas_src>
import math
import functools

import jax
import jax.numpy as jnp
from jax import lax
from jax.experimental import pallas as pl
from jax.experimental.pallas import tpu as pltpu

EMBED_DIM = 32
NUM_HEADS = 4
SEQ_LEN = 8
BATCH = 2
LN_EPS = 1e-5


def _layernorm(v, g, b):
    # v: (R, E); g/b: (1, E)
    mu = jnp.mean(v, axis=-1, keepdims=True)
    c = v - mu
    var = jnp.mean(c * c, axis=-1, keepdims=True)
    return c * lax.rsqrt(var + LN_EPS) * g + b


def sab_kernel(x_ref, slab_ref, o_ref, *, batch, seq, heads):
    """Fused SetAttentionBlock forward over all batch*seq rows at once.

    x_ref    : (B*S, E)       activations (f32)
    slab_ref : (4E+8, 4E)     packed parameters, lane-dense f32:
                 rows 0:E      -> [scale*Wq.T | Wk.T | Wv.T | 0]
                 rows E:2E     -> [Wo.T | 0]
                 rows 2E:3E    -> W1.T
                 rows 3E:4E    -> W2 (torch layout; contract last dims)
                 rows 4E:4E+8  -> biases / LayerNorm params (one per row)
    o_ref    : (B*S, E)       output
    """
    B, S, H = batch, seq, heads
    BS, E = x_ref.shape
    Dh = E // H

    x = x_ref[...]                                     # (BS, E) f32

    # ---- unpack the single lane-dense parameter slab (static, zero-cost views) ----
    w_qkv = slab_ref[0:E, :]                           # (E, 4E)
    w_o   = slab_ref[E:2 * E, 0:E]                     # (E, E)   Wo.T
    w_1   = slab_ref[2 * E:3 * E, :]                   # (E, 4E)  W1.T
    w_2   = slab_ref[3 * E:4 * E, :]                   # (E, 4E)  W2 (torch layout)
    bias  = slab_ref[4 * E:4 * E + 8, :]               # (8, 4E)
    b_qkv = bias[0:1, :]                               # (1, 4E)  [s*bq | bk | bv | 0]
    b_o   = bias[1:2, 0:E]
    g1    = bias[2:3, 0:E]
    b1    = bias[3:4, 0:E]
    g2    = bias[4:5, 0:E]
    b2    = bias[5:6, 0:E]
    b_f1  = bias[6:7, :]                               # (1, 4E)
    b_f2  = bias[7:8, 0:E]

    # ---- fused Q/K/V projection: one wide MXU matmul (softmax scale pre-folded) ----
    qkv = jnp.dot(x, w_qkv, preferred_element_type=jnp.float32) + b_qkv    # (BS, 4E)

    # ---- per-head scaled dot-product attention, no materialized head transpose ----
    ctx_heads = []
    for h in range(H):                                 # H = 4, unrolled at trace time
        q_h = qkv[:,         h * Dh:        (h + 1) * Dh].reshape(B, S, Dh)
        k_h = qkv[:,     E + h * Dh:     E + (h + 1) * Dh].reshape(B, S, Dh)
        v_h = qkv[:, 2 * E + h * Dh: 2 * E + (h + 1) * Dh].reshape(B, S, Dh)
        s = lax.dot_general(q_h, k_h, (((2,), (2,)), ((0,), (0,))),
                            preferred_element_type=jnp.float32)            # (B, S, S)
        s = s - jnp.max(s, axis=-1, keepdims=True)
        p = jnp.exp(s)
        p = p / jnp.sum(p, axis=-1, keepdims=True)      # exact reciprocal (tiny denom)
        # attention dropout is identity in eval mode
        ctx_heads.append(
            lax.dot_general(p, v_h, (((2,), (1,)), ((0,), (0,))),
                            preferred_element_type=jnp.float32))           # (B, S, Dh)
    ctx = jnp.concatenate(ctx_heads, axis=-1).reshape(BS, E)               # (BS, E)

    # ---- output projection + residual + LayerNorm 1 ----
    attended = jnp.dot(ctx, w_o, preferred_element_type=jnp.float32) + b_o
    y = _layernorm(x + attended, g1, b1)

    # ---- FFN: Linear -> ReLU -> Linear (dropout inactive in eval mode) ----
    h1 = jnp.maximum(
        jnp.dot(y, w_1, preferred_element_type=jnp.float32) + b_f1, 0.0)   # (BS, 4E)
    ff = lax.dot_general(h1, w_2, (((1,), (1,)), ((), ())),                # NT matmul
                         preferred_element_type=jnp.float32) + b_f2        # (BS, E)

    # ---- residual + LayerNorm 2, direct store ----
    o_ref[...] = _layernorm(y + ff, g2, b2)


def pack_params(p):
    """Host-side one-time repack of PyTorch-convention params into ONE lane-dense slab."""
    E = p['wo'].shape[0]
    W = 4 * E
    Dh = E // NUM_HEADS
    scale = 1.0 / math.sqrt(Dh)
    f32 = jnp.float32

    wq, wk, wv = jnp.split(p['wqkv'], 3, axis=0)        # each (E, E), torch (out, in)
    bq, bk, bv = jnp.split(p['bqkv'], 3)

    w_qkv = jnp.concatenate(
        [scale * wq.T, wk.T, wv.T, jnp.zeros((E, E), f32)], axis=1)        # (E, 4E)
    w_o = jnp.concatenate(
        [p['wo'].T, jnp.zeros((E, W - E), f32)], axis=1)                   # (E, 4E)
    w_1 = p['w1'].T                                                        # (E, 4E)
    w_2 = p['w2']                                                          # (E, 4E)

    pad = lambda v: jnp.pad(v, (0, W - v.shape[0]))
    bias = jnp.stack([
        jnp.concatenate([scale * bq, bk, bv, jnp.zeros((E,), f32)]),       # b_qkv
        pad(p['bo']), pad(p['g1']), pad(p['b1']),
        pad(p['g2']), pad(p['b2']),
        p['bff1'], pad(p['bff2']),
    ])                                                                     # (8, 4E)

    slab = jnp.concatenate([w_qkv, w_o, w_1, w_2, bias], axis=0).astype(f32)
    return {'slab': slab}                                                  # (4E+8, 4E)


def set_attention_block(x, packed):
    B, S, E = x.shape
    x2 = x.reshape(B * S, E)                           # free view
    kernel = functools.partial(sab_kernel, batch=B, seq=S, heads=NUM_HEADS)
    vmem = lambda: pl.BlockSpec(memory_space=pltpu.MemorySpace.VMEM)

    out = pl.pallas_call(
        kernel,
        out_shape=jax.ShapeDtypeStruct((B * S, E), jnp.float32),
        in_specs=[vmem(), vmem()],
        out_specs=vmem(),
    )(x2, packed['slab'])
    return out.reshape(B, S, E)                        # free view


def init_params(key, embed_dim):
    E = embed_dim
    ks = jax.random.split(key, 8)
    s = 0.05
    return {
        # nn.MultiheadAttention fused in_proj: (3E, E), bias (3E,)
        'wqkv': s * jax.random.normal(ks[0], (3 * E, E), jnp.float32),
        'bqkv': s * jax.random.normal(ks[1], (3 * E,), jnp.float32),
        # out_proj
        'wo': s * jax.random.normal(ks[2], (E, E), jnp.float32),
        'bo': s * jax.random.normal(ks[3], (E,), jnp.float32),
        # LayerNorms
        'g1': jnp.ones((E,), jnp.float32), 'b1': jnp.zeros((E,), jnp.float32),
        'g2': jnp.ones((E,), jnp.float32), 'b2': jnp.zeros((E,), jnp.float32),
        # FFN: Linear(E, 4E), Linear(4E, E)
        'w1': s * jax.random.normal(ks[4], (4 * E, E), jnp.float32),
        'bff1': s * jax.random.normal(ks[5], (4 * E,), jnp.float32),
        'w2': s * jax.random.normal(ks[6], (E, 4 * E), jnp.float32),
        'bff2': s * jax.random.normal(ks[7], (E,), jnp.float32),
    }


def reference(x, p):
    """Pure-JAX reference mirroring the PyTorch forward (eval mode), exact f32 matmuls."""
    B, S, E = x.shape
    H = NUM_HEADS
    Dh = E // H
    prec = lax.Precision.HIGHEST

    def ln(v, g, b):
        mu = jnp.mean(v, -1, keepdims=True)
        var = jnp.mean((v - mu) ** 2, -1, keepdims=True)
        return (v - mu) * lax.rsqrt(var + LN_EPS) * g + b

    qkv = jnp.einsum('bse,fe->bsf', x, p['wqkv'], precision=prec) + p['bqkv']
    q, k, v = jnp.split(qkv, 3, axis=-1)
    q = q.reshape(B, S, H, Dh)
    k = k.reshape(B, S, H, Dh)
    v = v.reshape(B, S, H, Dh)
    s = jnp.einsum('bshd,bthd->bhst', q, k, precision=prec) / math.sqrt(Dh)
    pr = jax.nn.softmax(s, axis=-1)
    ctx = jnp.einsum('bhst,bthd->bshd', pr, v, precision=prec).reshape(B, S, E)
    att = jnp.einsum('bse,fe->bsf', ctx, p['wo'], precision=prec) + p['bo']
    y = ln(x + att, p['g1'], p['b1'])
    h = jax.nn.relu(jnp.einsum('bse,fe->bsf', y, p['w1'], precision=prec) + p['bff1'])
    ff = jnp.einsum('bsf,ef->bse', h, p['w2'], precision=prec) + p['bff2']
    return ln(y + ff, p['g2'], p['b2'])


if __name__ == "__main__":
    key = jax.random.PRNGKey(0)
    k_x, k_p = jax.random.split(key)
    x = jax.random.normal(k_x, (BATCH, SEQ_LEN, EMBED_DIM), jnp.float32)
    params = init_params(k_p, EMBED_DIM)
    packed = pack_params(params)             # host-side prep, done once per model

    out = set_attention_block(x, packed)
    out = jax.block_until_ready(out)

    ref = reference(x, params)
    assert out.shape == (BATCH, SEQ_LEN, EMBED_DIM)
    # Exact softmax reciprocal restored -> tolerance back to 1e-4 (kernel is f32
    # end-to-end; reference uses HIGHEST-precision f32 matmuls to match the MXU).
    assert jnp.allclose(out, ref, rtol=1e-4, atol=1e-4), "mismatch vs reference"
    print("KERNEL_OK")
</pallas_src>

<mosaic_0001>
module attributes {stable_mosaic.version = 11 : i64} {
  func.func @sab_kernel(%arg0: memref<16x32xf32, #tpu.memory_space<vmem>>, %arg1: memref<136x128xf32, #tpu.memory_space<vmem>>, %arg2: memref<16x32xf32, #tpu.memory_space<vmem>>) attributes {dimension_semantics = [], scalar_prefetch = 0 : i64, scratch_operands = 0 : i64, tpu.core_type = #tpu.core_type<tc>} {
    %c0 = arith.constant 0 : index
    %c0_0 = arith.constant 0 : index
    %0 = vector.load %arg0[%c0, %c0_0] : memref<16x32xf32, #tpu.memory_space<vmem>>, vector<16x32xf32>
    %c0_1 = arith.constant 0 : index
    %c0_2 = arith.constant 0 : index
    %1 = vector.load %arg1[%c0_1, %c0_2] : memref<136x128xf32, #tpu.memory_space<vmem>>, vector<32x128xf32>
    %c32 = arith.constant 32 : index
    %c0_3 = arith.constant 0 : index
    %2 = vector.load %arg1[%c32, %c0_3] : memref<136x128xf32, #tpu.memory_space<vmem>>, vector<32x32xf32>
    %c64 = arith.constant 64 : index
    %c0_4 = arith.constant 0 : index
    %3 = vector.load %arg1[%c64, %c0_4] : memref<136x128xf32, #tpu.memory_space<vmem>>, vector<32x128xf32>
    %c96 = arith.constant 96 : index
    %c0_5 = arith.constant 0 : index
    %4 = vector.load %arg1[%c96, %c0_5] : memref<136x128xf32, #tpu.memory_space<vmem>>, vector<32x128xf32>
    %c128 = arith.constant 128 : index
    %c0_6 = arith.constant 0 : index
    %5 = vector.load %arg1[%c128, %c0_6] : memref<136x128xf32, #tpu.memory_space<vmem>>, vector<8x128xf32>
    %6 = vector.extract_strided_slice %5 {offsets = [0, 0], sizes = [1, 128], strides = [1, 1]} : vector<8x128xf32> to vector<1x128xf32>
    %7 = vector.extract_strided_slice %5 {offsets = [1, 0], sizes = [1, 32], strides = [1, 1]} : vector<8x128xf32> to vector<1x32xf32>
    %8 = vector.extract_strided_slice %5 {offsets = [2, 0], sizes = [1, 32], strides = [1, 1]} : vector<8x128xf32> to vector<1x32xf32>
    %9 = vector.extract_strided_slice %5 {offsets = [3, 0], sizes = [1, 32], strides = [1, 1]} : vector<8x128xf32> to vector<1x32xf32>
    %10 = vector.extract_strided_slice %5 {offsets = [4, 0], sizes = [1, 32], strides = [1, 1]} : vector<8x128xf32> to vector<1x32xf32>
    %11 = vector.extract_strided_slice %5 {offsets = [5, 0], sizes = [1, 32], strides = [1, 1]} : vector<8x128xf32> to vector<1x32xf32>
    %12 = vector.extract_strided_slice %5 {offsets = [6, 0], sizes = [1, 128], strides = [1, 1]} : vector<8x128xf32> to vector<1x128xf32>
    %13 = vector.extract_strided_slice %5 {offsets = [7, 0], sizes = [1, 32], strides = [1, 1]} : vector<8x128xf32> to vector<1x32xf32>
    %cst = arith.constant dense<0.000000e+00> : vector<16x128xf32>
    %14 = tpu.matmul %0, %1, %cst {dimension_numbers = #tpu.dot_dimension_numbers<[1], [0], [0], [1], [0, 0, 1, 1], [], []>} : vector<16x32xf32>, vector<32x128xf32>, vector<16x128xf32> -> vector<16x128xf32>
    %15 = vector.broadcast %6 : vector<1x128xf32> to vector<16x128xf32>
    %16 = arith.addf %14, %15 : vector<16x128xf32>
    %17 = vector.extract_strided_slice %16 {offsets = [0, 0], sizes = [16, 8], strides = [1, 1]} : vector<16x128xf32> to vector<16x8xf32>
    %18 = vector.shape_cast %17 : vector<16x8xf32> to vector<2x8x8xf32>
    %19 = vector.extract_strided_slice %16 {offsets = [0, 32], sizes = [16, 8], strides = [1, 1]} : vector<16x128xf32> to vector<16x8xf32>
    %20 = vector.shape_cast %19 : vector<16x8xf32> to vector<2x8x8xf32>
    %21 = vector.extract_strided_slice %16 {offsets = [0, 64], sizes = [16, 8], strides = [1, 1]} : vector<16x128xf32> to vector<16x8xf32>
    %22 = vector.shape_cast %21 : vector<16x8xf32> to vector<2x8x8xf32>
    %cst_7 = arith.constant dense<0.000000e+00> : vector<2x8x8xf32>
    %23 = tpu.matmul %18, %20, %cst_7 {dimension_numbers = #tpu.dot_dimension_numbers<[2], [2], [1], [1], [0, 0, 0, 1, 1, 1], [0], [0]>} : vector<2x8x8xf32>, vector<2x8x8xf32>, vector<2x8x8xf32> -> vector<2x8x8xf32>
    %cst_8 = arith.constant dense<0xFF800000> : vector<2x8xf32>
    %24 = vector.multi_reduction <maximumf>, %23, %cst_8 [2] : vector<2x8x8xf32> to vector<2x8xf32>
    %25 = vector.shape_cast %24 : vector<2x8xf32> to vector<2x8x1xf32>
    %26 = vector.broadcast %25 : vector<2x8x1xf32> to vector<2x8x8xf32>
    %27 = arith.subf %23, %26 : vector<2x8x8xf32>
    %28 = math.exp %27 : vector<2x8x8xf32>
    %cst_9 = arith.constant dense<0.000000e+00> : vector<2x8xf32>
    %29 = vector.multi_reduction <add>, %28, %cst_9 [2] : vector<2x8x8xf32> to vector<2x8xf32>
    %30 = vector.shape_cast %29 : vector<2x8xf32> to vector<2x8x1xf32>
    %31 = vector.broadcast %30 : vector<2x8x1xf32> to vector<2x8x8xf32>
    %32 = arith.divf %28, %31 : vector<2x8x8xf32>
    %cst_10 = arith.constant dense<0.000000e+00> : vector<2x8x8xf32>
    %33 = tpu.matmul %32, %22, %cst_10 {dimension_numbers = #tpu.dot_dimension_numbers<[2], [1], [1], [2], [0, 0, 0, 1, 1, 2], [0], [0]>} : vector<2x8x8xf32>, vector<2x8x8xf32>, vector<2x8x8xf32> -> vector<2x8x8xf32>
    %34 = vector.extract_strided_slice %16 {offsets = [0, 8], sizes = [16, 8], strides = [1, 1]} : vector<16x128xf32> to vector<16x8xf32>
    %35 = vector.shape_cast %34 : vector<16x8xf32> to vector<2x8x8xf32>
    %36 = vector.extract_strided_slice %16 {offsets = [0, 40], sizes = [16, 8], strides = [1, 1]} : vector<16x128xf32> to vector<16x8xf32>
    %37 = vector.shape_cast %36 : vector<16x8xf32> to vector<2x8x8xf32>
    %38 = vector.extract_strided_slice %16 {offsets = [0, 72], sizes = [16, 8], strides = [1, 1]} : vector<16x128xf32> to vector<16x8xf32>
    %39 = vector.shape_cast %38 : vector<16x8xf32> to vector<2x8x8xf32>
    %cst_11 = arith.constant dense<0.000000e+00> : vector<2x8x8xf32>
    %40 = tpu.matmul %35, %37, %cst_11 {dimension_numbers = #tpu.dot_dimension_numbers<[2], [2], [1], [1], [0, 0, 0, 1, 1, 1], [0], [0]>} : vector<2x8x8xf32>, vector<2x8x8xf32>, vector<2x8x8xf32> -> vector<2x8x8xf32>
    %cst_12 = arith.constant dense<0xFF800000> : vector<2x8xf32>
    %41 = vector.multi_reduction <maximumf>, %40, %cst_12 [2] : vector<2x8x8xf32> to vector<2x8xf32>
    %42 = vector.shape_cast %41 : vector<2x8xf32> to vector<2x8x1xf32>
    %43 = vector.broadcast %42 : vector<2x8x1xf32> to vector<2x8x8xf32>
    %44 = arith.subf %40, %43 : vector<2x8x8xf32>
    %45 = math.exp %44 : vector<2x8x8xf32>
    %cst_13 = arith.constant dense<0.000000e+00> : vector<2x8xf32>
    %46 = vector.multi_reduction <add>, %45, %cst_13 [2] : vector<2x8x8xf32> to vector<2x8xf32>
    %47 = vector.shape_cast %46 : vector<2x8xf32> to vector<2x8x1xf32>
    %48 = vector.broadcast %47 : vector<2x8x1xf32> to vector<2x8x8xf32>
    %49 = arith.divf %45, %48 : vector<2x8x8xf32>
    %cst_14 = arith.constant dense<0.000000e+00> : vector<2x8x8xf32>
    %50 = tpu.matmul %49, %39, %cst_14 {dimension_numbers = #tpu.dot_dimension_numbers<[2], [1], [1], [2], [0, 0, 0, 1, 1, 2], [0], [0]>} : vector<2x8x8xf32>, vector<2x8x8xf32>, vector<2x8x8xf32> -> vector<2x8x8xf32>
    %51 = vector.extract_strided_slice %16 {offsets = [0, 16], sizes = [16, 8], strides = [1, 1]} : vector<16x128xf32> to vector<16x8xf32>
    %52 = vector.shape_cast %51 : vector<16x8xf32> to vector<2x8x8xf32>
    %53 = vector.extract_strided_slice %16 {offsets = [0, 48], sizes = [16, 8], strides = [1, 1]} : vector<16x128xf32> to vector<16x8xf32>
    %54 = vector.shape_cast %53 : vector<16x8xf32> to vector<2x8x8xf32>
    %55 = vector.extract_strided_slice %16 {offsets = [0, 80], sizes = [16, 8], strides = [1, 1]} : vector<16x128xf32> to vector<16x8xf32>
    %56 = vector.shape_cast %55 : vector<16x8xf32> to vector<2x8x8xf32>
    %cst_15 = arith.constant dense<0.000000e+00> : vector<2x8x8xf32>
    %57 = tpu.matmul %52, %54, %cst_15 {dimension_numbers = #tpu.dot_dimension_numbers<[2], [2], [1], [1], [0, 0, 0, 1, 1, 1], [0], [0]>} : vector<2x8x8xf32>, vector<2x8x8xf32>, vector<2x8x8xf32> -> vector<2x8x8xf32>
    %cst_16 = arith.constant dense<0xFF800000> : vector<2x8xf32>
    %58 = vector.multi_reduction <maximumf>, %57, %cst_16 [2] : vector<2x8x8xf32> to vector<2x8xf32>
    %59 = vector.shape_cast %58 : vector<2x8xf32> to vector<2x8x1xf32>
    %60 = vector.broadcast %59 : vector<2x8x1xf32> to vector<2x8x8xf32>
    %61 = arith.subf %57, %60 : vector<2x8x8xf32>
    %62 = math.exp %61 : vector<2x8x8xf32>
    %cst_17 = arith.constant dense<0.000000e+00> : vector<2x8xf32>
    %63 = vector.multi_reduction <add>, %62, %cst_17 [2] : vector<2x8x8xf32> to vector<2x8xf32>
    %64 = vector.shape_cast %63 : vector<2x8xf32> to vector<2x8x1xf32>
    %65 = vector.broadcast %64 : vector<2x8x1xf32> to vector<2x8x8xf32>
    %66 = arith.divf %62, %65 : vector<2x8x8xf32>
    %cst_18 = arith.constant dense<0.000000e+00> : vector<2x8x8xf32>
    %67 = tpu.matmul %66, %56, %cst_18 {dimension_numbers = #tpu.dot_dimension_numbers<[2], [1], [1], [2], [0, 0, 0, 1, 1, 2], [0], [0]>} : vector<2x8x8xf32>, vector<2x8x8xf32>, vector<2x8x8xf32> -> vector<2x8x8xf32>
    %68 = vector.extract_strided_slice %16 {offsets = [0, 24], sizes = [16, 8], strides = [1, 1]} : vector<16x128xf32> to vector<16x8xf32>
    %69 = vector.shape_cast %68 : vector<16x8xf32> to vector<2x8x8xf32>
    %70 = vector.extract_strided_slice %16 {offsets = [0, 56], sizes = [16, 8], strides = [1, 1]} : vector<16x128xf32> to vector<16x8xf32>
    %71 = vector.shape_cast %70 : vector<16x8xf32> to vector<2x8x8xf32>
    %72 = vector.extract_strided_slice %16 {offsets = [0, 88], sizes = [16, 8], strides = [1, 1]} : vector<16x128xf32> to vector<16x8xf32>
    %73 = vector.shape_cast %72 : vector<16x8xf32> to vector<2x8x8xf32>
    %cst_19 = arith.constant dense<0.000000e+00> : vector<2x8x8xf32>
    %74 = tpu.matmul %69, %71, %cst_19 {dimension_numbers = #tpu.dot_dimension_numbers<[2], [2], [1], [1], [0, 0, 0, 1, 1, 1], [0], [0]>} : vector<2x8x8xf32>, vector<2x8x8xf32>, vector<2x8x8xf32> -> vector<2x8x8xf32>
    %cst_20 = arith.constant dense<0xFF800000> : vector<2x8xf32>
    %75 = vector.multi_reduction <maximumf>, %74, %cst_20 [2] : vector<2x8x8xf32> to vector<2x8xf32>
    %76 = vector.shape_cast %75 : vector<2x8xf32> to vector<2x8x1xf32>
    %77 = vector.broadcast %76 : vector<2x8x1xf32> to vector<2x8x8xf32>
    %78 = arith.subf %74, %77 : vector<2x8x8xf32>
    %79 = math.exp %78 : vector<2x8x8xf32>
    %cst_21 = arith.constant dense<0.000000e+00> : vector<2x8xf32>
    %80 = vector.multi_reduction <add>, %79, %cst_21 [2] : vector<2x8x8xf32> to vector<2x8xf32>
    %81 = vector.shape_cast %80 : vector<2x8xf32> to vector<2x8x1xf32>
    %82 = vector.broadcast %81 : vector<2x8x1xf32> to vector<2x8x8xf32>
    %83 = arith.divf %79, %82 : vector<2x8x8xf32>
    %cst_22 = arith.constant dense<0.000000e+00> : vector<2x8x8xf32>
    %84 = tpu.matmul %83, %73, %cst_22 {dimension_numbers = #tpu.dot_dimension_numbers<[2], [1], [1], [2], [0, 0, 0, 1, 1, 2], [0], [0]>} : vector<2x8x8xf32>, vector<2x8x8xf32>, vector<2x8x8xf32> -> vector<2x8x8xf32>
    %85 = tpu.concatenate %33, %50, %67, %84 in 2 : vector<2x8x8xf32>, vector<2x8x8xf32>, vector<2x8x8xf32>, vector<2x8x8xf32> -> vector<2x8x32xf32>
    %86 = vector.shape_cast %85 : vector<2x8x32xf32> to vector<16x32xf32>
    %cst_23 = arith.constant dense<0.000000e+00> : vector<16x32xf32>
    %87 = tpu.matmul %86, %2, %cst_23 {dimension_numbers = #tpu.dot_dimension_numbers<[1], [0], [0], [1], [0, 0, 1, 1], [], []>} : vector<16x32xf32>, vector<32x32xf32>, vector<16x32xf32> -> vector<16x32xf32>
    %88 = vector.broadcast %7 : vector<1x32xf32> to vector<16x32xf32>
    %89 = arith.addf %87, %88 : vector<16x32xf32>
    %90 = arith.addf %0, %89 : vector<16x32xf32>
    %cst_24 = arith.constant dense<0.000000e+00> : vector<16xf32>
    %91 = vector.multi_reduction <add>, %90, %cst_24 [1] : vector<16x32xf32> to vector<16xf32>
    %92 = vector.shape_cast %91 : vector<16xf32> to vector<16x1xf32>
    %cst_25 = arith.constant 3.200000e+01 : f32
    %93 = vector.broadcast %cst_25 : f32 to vector<16x1xf32>
    %94 = arith.divf %92, %93 : vector<16x1xf32>
    %95 = vector.broadcast %94 : vector<16x1xf32> to vector<16x32xf32>
    %96 = arith.subf %90, %95 : vector<16x32xf32>
    %97 = arith.mulf %96, %96 : vector<16x32xf32>
    %cst_26 = arith.constant dense<0.000000e+00> : vector<16xf32>
    %98 = vector.multi_reduction <add>, %97, %cst_26 [1] : vector<16x32xf32> to vector<16xf32>
    %99 = vector.shape_cast %98 : vector<16xf32> to vector<16x1xf32>
    %cst_27 = arith.constant 3.200000e+01 : f32
    %100 = vector.broadcast %cst_27 : f32 to vector<16x1xf32>
    %101 = arith.divf %99, %100 : vector<16x1xf32>
    %cst_28 = arith.constant 9.99999974E-6 : f32
    %102 = vector.broadcast %cst_28 : f32 to vector<16x1xf32>
    %103 = arith.addf %101, %102 : vector<16x1xf32>
    %104 = math.rsqrt %103 : vector<16x1xf32>
    %105 = vector.broadcast %104 : vector<16x1xf32> to vector<16x32xf32>
    %106 = arith.mulf %96, %105 : vector<16x32xf32>
    %107 = vector.broadcast %8 : vector<1x32xf32> to vector<16x32xf32>
    %108 = arith.mulf %106, %107 : vector<16x32xf32>
    %109 = vector.broadcast %9 : vector<1x32xf32> to vector<16x32xf32>
    %110 = arith.addf %108, %109 : vector<16x32xf32>
    %cst_29 = arith.constant dense<0.000000e+00> : vector<16x128xf32>
    %111 = tpu.matmul %110, %3, %cst_29 {dimension_numbers = #tpu.dot_dimension_numbers<[1], [0], [0], [1], [0, 0, 1, 1], [], []>} : vector<16x32xf32>, vector<32x128xf32>, vector<16x128xf32> -> vector<16x128xf32>
    %112 = vector.broadcast %12 : vector<1x128xf32> to vector<16x128xf32>
    %113 = arith.addf %111, %112 : vector<16x128xf32>
    %cst_30 = arith.constant 0.000000e+00 : f32
    %114 = vector.broadcast %cst_30 : f32 to vector<16x128xf32>
    %115 = arith.maximumf %113, %114 : vector<16x128xf32>
    %cst_31 = arith.constant dense<0.000000e+00> : vector<16x32xf32>
    %116 = tpu.matmul %115, %4, %cst_31 {dimension_numbers = #tpu.dot_dimension_numbers<[1], [1], [0], [0], [0, 0, 1, 0], [], []>} : vector<16x128xf32>, vector<32x128xf32>, vector<16x32xf32> -> vector<16x32xf32>
    %117 = vector.broadcast %13 : vector<1x32xf32> to vector<16x32xf32>
    %118 = arith.addf %116, %117 : vector<16x32xf32>
    %119 = arith.addf %110, %118 : vector<16x32xf32>
    %cst_32 = arith.constant dense<0.000000e+00> : vector<16xf32>
    %120 = vector.multi_reduction <add>, %119, %cst_32 [1] : vector<16x32xf32> to vector<16xf32>
    %121 = vector.shape_cast %120 : vector<16xf32> to vector<16x1xf32>
    %cst_33 = arith.constant 3.200000e+01 : f32
    %122 = vector.broadcast %cst_33 : f32 to vector<16x1xf32>
    %123 = arith.divf %121, %122 : vector<16x1xf32>
    %124 = vector.broadcast %123 : vector<16x1xf32> to vector<16x32xf32>
    %125 = arith.subf %119, %124 : vector<16x32xf32>
    %126 = arith.mulf %125, %125 : vector<16x32xf32>
    %cst_34 = arith.constant dense<0.000000e+00> : vector<16xf32>
    %127 = vector.multi_reduction <add>, %126, %cst_34 [1] : vector<16x32xf32> to vector<16xf32>
    %128 = vector.shape_cast %127 : vector<16xf32> to vector<16x1xf32>
    %cst_35 = arith.constant 3.200000e+01 : f32
    %129 = vector.broadcast %cst_35 : f32 to vector<16x1xf32>
    %130 = arith.divf %128, %129 : vector<16x1xf32>
    %cst_36 = arith.constant 9.99999974E-6 : f32
    %131 = vector.broadcast %cst_36 : f32 to vector<16x1xf32>
    %132 = arith.addf %130, %131 : vector<16x1xf32>
    %133 = math.rsqrt %132 : vector<16x1xf32>
    %134 = vector.broadcast %133 : vector<16x1xf32> to vector<16x32xf32>
    %135 = arith.mulf %125, %134 : vector<16x32xf32>
    %136 = vector.broadcast %10 : vector<1x32xf32> to vector<16x32xf32>
    %137 = arith.mulf %135, %136 : vector<16x32xf32>
    %138 = vector.broadcast %11 : vector<1x32xf32> to vector<16x32xf32>
    %139 = arith.addf %137, %138 : vector<16x32xf32>
    %c0_37 = arith.constant 0 : index
    %c0_38 = arith.constant 0 : index
    %140 = vector.load %arg2[%c0_37, %c0_38] : memref<16x32xf32, #tpu.memory_space<vmem>>, vector<16x32xf32>
    tpu.vector_store %arg2[%c0_37, %c0_38], %139 {strides = array<i32>} : memref<16x32xf32, #tpu.memory_space<vmem>>, vector<16x32xf32>,
    return
  }
}

</mosaic_0001>

<llo_original>
// kernel: tpu_custom_call.1
$region0: #{tpu_custom_call.1}
  #allocation0 [shape = 'u32[]', space=smem, size = 0x4, offset = 0x4, fixed_abs, tag = 'smem constant byte address 0x4 - core index']
  #allocation1 [shape = 'u32[144,128]{1,0:T(1,128)}', space=vmem, size = 0x12000, scoped, tag = 'internal scratch']
  %s0 = inlined_call_operand.hbm [shape: f32[16,32], index: 0, kind: input, shape index: {}]
  %s1 = inlined_call_operand.hbm [shape: f32[136,128], index: 1, kind: input, shape index: {}]
  %s2 = inlined_call_operand.hbm [shape: f32[16,32], index: 2, kind: output, shape index: {}]
  %s3 = sld [smem:[#allocation0]]
  $region26: #{tpu_custom_call.1} parent=0
    _
  %s5 = ssub.s32 1, %s3
  %s6 = scalar_select 0, %s5, %s3
  $region1: #{tpu_custom_call.1} parent=0
    #allocation2 [shape = 'u8[8192]{0}', space=vmem, size = 0x2000, scoped, tag = 'input window, operand 0, single buffered']
    #allocation3 [shape = 's32[1]{0}', space=sflag, size = 0x4, scoped, tag = 'scoped memory for tpu_custom_call.1']
    #allocation4 [shape = 's32[1]{0}', space=sflag, size = 0x4, scoped, tag = 'scoped memory for tpu_custom_call.1']
    #allocation5 [shape = 'u8[69632]{0}', space=vmem, size = 0x11000, scoped, tag = 'input window, operand 1, single buffered']
    #allocation6 [shape = 's32[1]{0}', space=sflag, size = 0x4, scoped, tag = 'scoped memory for tpu_custom_call.1']
    #allocation7 [shape = 'u8[8192]{0}', space=vmem, size = 0x2000, scoped, tag = 'output window, operand 0, single buffered']
    %7 = vsyncpa [#allocation3], 0
    %8 = vsyncpa [#allocation6], 0
    %9 = vsyncpa [#allocation4], 0
    // Predicated region
    $region2: #{tpu_custom_call.1} parent=1 // pred_check
      _
    $region3: #{tpu_custom_call.1} parent=1 // pred_check_branch
      %11 = sbr.rel (0) target = $region5
    $region4: #{tpu_custom_call.1} parent=1 // pred_region
      %s13 = ssub.s32 256, 256
      %14 = vsyncadd [#allocation3], %s13
      %s15 = sshll.u32 [#allocation2], 4
      %s16 = int_to_ptr.vmem [resolvable:$true] %s15
      %21 = dma.hbm_to_vmem [thread:$0]  %s0, 256, %s16, [#allocation3], 128, 128, 8
    $region5: #{tpu_custom_call.1} parent=1 // pred_fallthru
      _
    // Predicated region
    $region6: #{tpu_custom_call.1} parent=1 // pred_check
      _
    $region7: #{tpu_custom_call.1} parent=1 // pred_check_branch
      %23 = sbr.rel (0) target = $region9
    $region8: #{tpu_custom_call.1} parent=1 // pred_region
      %s25 = ssub.s32 2176, 2176
      %26 = vsyncadd [#allocation6], %s25
      %s27 = sshll.u32 [#allocation5], 4
      %s28 = int_to_ptr.vmem [resolvable:$true] %s27
      %33 = dma.hbm_to_vmem [thread:$0]  %s1, 2176, %s28, [#allocation6], 128, 128, 8
    $region9: #{tpu_custom_call.1} parent=1 // pred_fallthru
      _
    // Predicated region
    $region10: #{tpu_custom_call.1} parent=1 // pred_check
      _
    $region11: #{tpu_custom_call.1} parent=1 // pred_check_branch
      %35 = sbr.rel (0) target = $region13
    $region12: #{tpu_custom_call.1} parent=1 // pred_region
      %36 = dma.done [#allocation3], 256
    $region13: #{tpu_custom_call.1} parent=1 // pred_fallthru
      _
    // Predicated region
    $region14: #{tpu_custom_call.1} parent=1 // pred_check
      _
    $region15: #{tpu_custom_call.1} parent=1 // pred_check_branch
      %38 = sbr.rel (0) target = $region17
    $region16: #{tpu_custom_call.1} parent=1 // pred_region
      %39 = dma.done [#allocation6], 2176
    $region17: #{tpu_custom_call.1} parent=1 // pred_fallthru
      _
    %v40 = vld [vmem:[#allocation2] sm:$0xff]
    %v41 = vld [vmem:[#allocation2 + $0x8] sm:$0xff]
    %v42 = vld [vmem:[#allocation5] sm:$0xff]
    %v43 = vld [vmem:[#allocation5 + $0x8] sm:$0xff]
    %v44 = vld [vmem:[#allocation5 + $0x10] sm:$0xff]
    %v45 = vld [vmem:[#allocation5 + $0x18] sm:$0xff]
    %v46 = vld [vmem:[#allocation5 + $0x20] sm:$0xff]
    %v47 = vld [vmem:[#allocation5 + $0x28] sm:$0xff]
    %v48 = vld [vmem:[#allocation5 + $0x30] sm:$0xff]
    %v49 = vld [vmem:[#allocation5 + $0x38] sm:$0xff]
    %v50 = vld [vmem:[#allocation5 + $0x40] sm:$0xff]
    %v51 = vld [vmem:[#allocation5 + $0x48] sm:$0xff]
    %v52 = vld [vmem:[#allocation5 + $0x50] sm:$0xff]
    %v53 = vld [vmem:[#allocation5 + $0x58] sm:$0xff]
    %v54 = vld [vmem:[#allocation5 + $0x60] sm:$0xff]
    %v55 = vld [vmem:[#allocation5 + $0x68] sm:$0xff]
    %v56 = vld [vmem:[#allocation5 + $0x70] sm:$0xff]
    %v57 = vld [vmem:[#allocation5 + $0x78] sm:$0xff]
    %v58 = vld [vmem:[#allocation5 + $0x80] sm:$0xff]
    %v59 = vlaneseq
    %v60 = vshrl.u32 %v59, 7
    %v61 = vsub.s32 0, %v60
    %v62 = vrot.slane %v58, %v61
    %vm63 = vcmask 261120
    %v65 = vsel %vm63, %v40, 0
    %v68 = vsel %vm63, %v41, 0
    %70 = vmatprep.subr.mxu0 0.0
    %71 = vmatpush1.msra.mxu0 %v42
    %72 = vmatprep.subr.mxu0 0.0
    %73 = vmatpush1.msra.mxu0 %v43
    %74 = vmatprep.subr.mxu0 0.0
    %75 = vmatpush1.msra.mxu0 %v44
    %76 = vmatprep.subr.mxu0 0.0
    %77 = vmatpush1.msra.mxu0 %v45
    %78 = vmatprep.subr.mxu0 0.0
    %79 = vmatpush1.msra.mxu0 0.0
    %80 = vmatprep.subr.mxu0 0.0
    %81 = vmatpush1.msra.mxu0 0.0
    %82 = vmatprep.subr.mxu0 0.0
    %83 = vmatpush1.msra.mxu0 0.0
    %84 = vmatprep.subr.mxu0 0.0
    %85 = vmatpush1.msra.mxu0 0.0
    %86 = vmatprep.subr.mxu0 0.0
    %87 = vmatpush1.msra.mxu0 0.0
    %88 = vmatprep.subr.mxu0 0.0
    %89 = vmatpush1.msra.mxu0 0.0
    %90 = vmatprep.subr.mxu0 0.0
    %91 = vmatpush1.msra.mxu0 0.0
    %92 = vmatprep.subr.mxu0 0.0
    %93 = vmatpush1.msra.mxu0 0.0
    %94 = vmatprep.subr.mxu0 0.0
    %95 = vmatpush1.msra.mxu0 0.0
    %96 = vmatprep.subr.mxu0 0.0
    %97 = vmatpush1.msra.mxu0 0.0
    %98 = vmatprep.subr.mxu0 0.0
    %99 = vmatpush1.msra.mxu0 0.0
    %100 = vmatprep.subr.mxu0 0.0
    %101 = vmatpush1.msra.mxu0 0.0
    %102 = vmatprep.subr.mxu0 0.0
    %103 = vmatpush1.msra.mxu0 0.0
    %104 = vmatprep.subr.mxu0 0.0
    %105 = vmatpush1.msra.mxu0 0.0
    %106 = vmatprep.subr.mxu0 0.0
    %107 = vmatpush1.msra.mxu0 0.0
    %108 = vmatprep.subr.mxu0 0.0
    %109 = vmatpush1.msra.mxu0 0.0
    %110 = vmatprep.subr.mxu0 0.0
    %111 = vmatpush1.msra.mxu0 0.0
    %112 = vmatprep.subr.mxu0 0.0
    %113 = vmatpush1.msra.mxu0 0.0
    %114 = vmatprep.subr.mxu0 0.0
    %115 = vmatpush1.msra.mxu0 0.0
    %116 = vmatprep.subr.mxu0 0.0
    %117 = vmatpush1.msra.mxu0 0.0
    %118 = vmatprep.subr.mxu0 0.0
    %119 = vmatpush1.msra.mxu0 0.0
    %120 = vmatprep.subr.mxu0 0.0
    %121 = vmatpush1.msra.mxu0 0.0
    %122 = vmatprep.subr.mxu0 0.0
    %123 = vmatpush1.msra.mxu0 0.0
    %124 = vmatprep.subr.mxu0 0.0
    %125 = vmatpush1.msra.mxu0 0.0
    %126 = vmatprep.subr.mxu0 0.0
    %127 = vmatpush1.msra.mxu0 0.0
    %128 = vmatprep.subr.mxu0 0.0
    %129 = vmatpush1.msra.mxu0 0.0
    %130 = vmatprep.subr.mxu0 0.0
    %131 = vmatpush1.msra.mxu0 0.0
    %132 = vmatprep.subr.mxu0 0.0
    %133 = vmatpush1.msra.mxu0 0.0
    %134 = vmatprep.mubr.f32.mxu0 0.0
    %135 = vmatmul.mubr.f32.gmra.mrb[0].mxu0 %v65
    %v136 = vpop.f32.mrb[0].mxu0
    %v137 = vadd.f32 %v62, %v136
    %v138 = vpop.f32.mrb[0].mxu0
    %139 = vmatprep.mubr.f32.mxu0 0.0
    %140 = vmatmul.mubr.f32.gmra.mrb[0].mxu0 %v68
    %v141 = vpop.f32.mrb[0].mxu0
    %v142 = vadd.f32 %v62, %v141
    %v143 = vpop.f32.mrb[0].mxu0
    %144 = vdwg.mxu0
    %146 = vrot.lane.b32.xlu0 %v137, 96
    %v147 = vpop.permute.xlu0 %146
    %vm148 = vcmask 64512
    %v149 = vsel %vm148, %v137, 0
    %v151 = vsel %vm148, %v147, 0
    %153 = vmatprep.subr.mxu0 0.0
    %154 = vmatpush1.xpose.msra.mxu0 %v151
    %155 = vmatprep.subr.mxu0 0.0
    %156 = vmatpush1.xpose.msra.mxu0 0.0
    %157 = vmatprep.subr.mxu0 0.0
    %158 = vmatpush1.xpose.msra.mxu0 0.0
    %159 = vmatprep.subr.mxu0 0.0
    %160 = vmatpush1.xpose.msra.mxu0 0.0
    %161 = vmatprep.subr.mxu0 0.0
    %162 = vmatpush1.xpose.msra.mxu0 0.0
    %163 = vmatprep.subr.mxu0 0.0
    %164 = vmatpush1.xpose.msra.mxu0 0.0
    %165 = vmatprep.subr.mxu0 0.0
    %166 = vmatpush1.xpose.msra.mxu0 0.0
    %167 = vmatprep.subr.mxu0 0.0
    %168 = vmatpush1.xpose.msra.mxu0 0.0
    %169 = vmatprep.subr.mxu0 0.0
    %170 = vmatpush1.xpose.msra.mxu0 0.0
    %171 = vmatprep.subr.mxu0 0.0
    %172 = vmatpush1.xpose.msra.mxu0 0.0
    %173 = vmatprep.subr.mxu0 0.0
    %174 = vmatpush1.xpose.msra.mxu0 0.0
    %175 = vmatprep.subr.mxu0 0.0
    %176 = vmatpush1.xpose.msra.mxu0 0.0
    %177 = vmatprep.subr.mxu0 0.0
    %178 = vmatpush1.xpose.msra.mxu0 0.0
    %179 = vmatprep.subr.mxu0 0.0
    %180 = vmatpush1.xpose.msra.mxu0 0.0
    %181 = vmatprep.subr.mxu0 0.0
    %182 = vmatpush1.xpose.msra.mxu0 0.0
    %183 = vmatprep.subr.mxu0 0.0
    %184 = vmatpush1.xpose.msra.mxu0 0.0
    %185 = vmatprep.subr.mxu0 0.0
    %186 = vmatpush1.xpose.msra.mxu0 0.0
    %187 = vmatprep.subr.mxu0 0.0
    %188 = vmatpush1.xpose.msra.mxu0 0.0
    %189 = vmatprep.subr.mxu0 0.0
    %190 = vmatpush1.xpose.msra.mxu0 0.0
    %191 = vmatprep.subr.mxu0 0.0
    %192 = vmatpush1.xpose.msra.mxu0 0.0
    %193 = vmatprep.subr.mxu0 0.0
    %194 = vmatpush1.xpose.msra.mxu0 0.0
    %195 = vmatprep.subr.mxu0 0.0
    %196 = vmatpush1.xpose.msra.mxu0 0.0
    %197 = vmatprep.subr.mxu0 0.0
    %198 = vmatpush1.xpose.msra.mxu0 0.0
    %199 = vmatprep.subr.mxu0 0.0
    %200 = vmatpush1.xpose.msra.mxu0 0.0
    %201 = vmatprep.subr.mxu0 0.0
    %202 = vmatpush1.xpose.msra.mxu0 0.0
    %203 = vmatprep.subr.mxu0 0.0
    %204 = vmatpush1.xpose.msra.mxu0 0.0
    %205 = vmatprep.subr.mxu0 0.0
    %206 = vmatpush1.xpose.msra.mxu0 0.0
    %207 = vmatprep.subr.mxu0 0.0
    %208 = vmatpush1.xpose.msra.mxu0 0.0
    %209 = vmatprep.subr.mxu0 0.0
    %210 = vmatpush1.xpose.msra.mxu0 0.0
    %211 = vmatprep.subr.mxu0 0.0
    %212 = vmatpush1.xpose.msra.mxu0 0.0
    %213 = vmatprep.subr.mxu0 0.0
    %214 = vmatpush1.xpose.msra.mxu0 0.0
    %215 = vmatprep.subr.mxu0 0.0
    %216 = vmatpush1.xpose.msra.mxu0 0.0
    %217 = vmatprep.mubr.f32.mxu0 0.0
    %218 = vmatmul.mubr.f32.gmra.mrb[0].mxu0 %v149
    %v219 = vpop.f32.mrb[0].mxu0
    %v220 = vadd.f32 0.0, %v219
    %v221 = vpop.f32.mrb[0].mxu0
    %222 = vdwg.mxu0
    %224 = vrot.lane.b32.xlu0 %v142, 96
    %v225 = vpop.permute.xlu0 %224
    %v226 = vsel %vm148, %v142, 0
    %v228 = vsel %vm148, %v225, 0
    %230 = vmatprep.subr.mxu0 0.0
    %231 = vmatpush1.xpose.msra.mxu0 %v228
    %232 = vmatprep.subr.mxu0 0.0
    %233 = vmatpush1.xpose.msra.mxu0 0.0
    %234 = vmatprep.subr.mxu0 0.0
    %235 = vmatpush1.xpose.msra.mxu0 0.0
    %236 = vmatprep.subr.mxu0 0.0
    %237 = vmatpush1.xpose.msra.mxu0 0.0
    %238 = vmatprep.subr.mxu0 0.0
    %239 = vmatpush1.xpose.msra.mxu0 0.0
    %240 = vmatprep.subr.mxu0 0.0
    %241 = vmatpush1.xpose.msra.mxu0 0.0
    %242 = vmatprep.subr.mxu0 0.0
    %243 = vmatpush1.xpose.msra.mxu0 0.0
    %244 = vmatprep.subr.mxu0 0.0
    %245 = vmatpush1.xpose.msra.mxu0 0.0
    %246 = vmatprep.subr.mxu0 0.0
    %247 = vmatpush1.xpose.msra.mxu0 0.0
    %248 = vmatprep.subr.mxu0 0.0
    %249 = vmatpush1.xpose.msra.mxu0 0.0
    %250 = vmatprep.subr.mxu0 0.0
    %251 = vmatpush1.xpose.msra.mxu0 0.0
    %252 = vmatprep.subr.mxu0 0.0
    %253 = vmatpush1.xpose.msra.mxu0 0.0
    %254 = vmatprep.subr.mxu0 0.0
    %255 = vmatpush1.xpose.msra.mxu0 0.0
    %256 = vmatprep.subr.mxu0 0.0
    %257 = vmatpush1.xpose.msra.mxu0 0.0
    %258 = vmatprep.subr.mxu0 0.0
    %259 = vmatpush1.xpose.msra.mxu0 0.0
    %260 = vmatprep.subr.mxu0 0.0
    %261 = vmatpush1.xpose.msra.mxu0 0.0
    %262 = vmatprep.subr.mxu0 0.0
    %263 = vmatpush1.xpose.msra.mxu0 0.0
    %264 = vmatprep.subr.mxu0 0.0
    %265 = vmatpush1.xpose.msra.mxu0 0.0
    %266 = vmatprep.subr.mxu0 0.0
    %267 = vmatpush1.xpose.msra.mxu0 0.0
    %268 = vmatprep.subr.mxu0 0.0
    %269 = vmatpush1.xpose.msra.mxu0 0.0
    %270 = vmatprep.subr.mxu0 0.0
    %271 = vmatpush1.xpose.msra.mxu0 0.0
    %272 = vmatprep.subr.mxu0 0.0
    %273 = vmatpush1.xpose.msra.mxu0 0.0
    %274 = vmatprep.subr.mxu0 0.0
    %275 = vmatpush1.xpose.msra.mxu0 0.0
    %276 = vmatprep.subr.mxu0 0.0
    %277 = vmatpush1.xpose.msra.mxu0 0.0
    %278 = vmatprep.subr.mxu0 0.0
    %279 = vmatpush1.xpose.msra.mxu0 0.0
    %280 = vmatprep.subr.mxu0 0.0
    %281 = vmatpush1.xpose.msra.mxu0 0.0
    %282 = vmatprep.subr.mxu0 0.0
    %283 = vmatpush1.xpose.msra.mxu0 0.0
    %284 = vmatprep.subr.mxu0 0.0
    %285 = vmatpush1.xpose.msra.mxu0 0.0
    %286 = vmatprep.subr.mxu0 0.0
    %287 = vmatpush1.xpose.msra.mxu0 0.0
    %288 = vmatprep.subr.mxu0 0.0
    %289 = vmatpush1.xpose.msra.mxu0 0.0
    %290 = vmatprep.subr.mxu0 0.0
    %291 = vmatpush1.xpose.msra.mxu0 0.0
    %292 = vmatprep.subr.mxu0 0.0
    %293 = vmatpush1.xpose.msra.mxu0 0.0
    %294 = vmatprep.mubr.f32.mxu0 0.0
    %295 = vmatmul.mubr.f32.gmra.mrb[0].mxu0 %v226
    %v296 = vpop.f32.mrb[0].mxu0
    %v297 = vadd.f32 0.0, %v296
    %v298 = vpop.f32.mrb[0].mxu0
    %299 = vdwg.mxu0
    %v300 = vsel %vm148, %v220, -inf
    %301 = vmax.xlane.f32.xlu0 %v300
    %v302 = vpop.xlane.xlu0 %301
    %v303 = vsel %vm148, %v297, -inf
    %304 = vmax.xlane.f32.xlu0 %v303
    %v305 = vpop.xlane.xlu0 %304
    %v306 = vsub.f32 %v220, %v302
    %v307 = vsub.f32 %v297, %v305
    %v308 = vmul.f32 %v306, 1.442695
    %v309 = vpow.pop %v308
    %v310 = vmul.f32 %v307, 1.442695
    %v311 = vpow.pop %v310
    %v312 = vsel %vm148, %v309, 0.0
    %313 = vadd.xlane.f32.xlu0 %v312
    %v314 = vpop.xlane.xlu0 %313
    %v315 = vsel %vm148, %v311, 0.0
    %316 = vadd.xlane.f32.xlu0 %v315
    %v317 = vpop.xlane.xlu0 %316
    %v318 = vrcp.pop %v314
    %v319 = vmul.f32 %v309, %v318
    %v320 = vrcp.pop %v317
    %v321 = vmul.f32 %v311, %v320
    %322 = vrot.lane.b32.xlu0 %v137, 64
    %v323 = vpop.permute.xlu0 %322
    %v326 = vsel %vm148, %v319, 0
    %328 = vmatprep.subr.mxu0 0.0
    %329 = vmatpush1.msra.mxu0 %v323
    %330 = vmatprep.subr.mxu0 0.0
    %331 = vmatpush1.msra.mxu0 0.0
    %332 = vmatprep.subr.mxu0 0.0
    %333 = vmatpush1.msra.mxu0 0.0
    %334 = vmatprep.subr.mxu0 0.0
    %335 = vmatpush1.msra.mxu0 0.0
    %336 = vmatprep.subr.mxu0 0.0
    %337 = vmatpush1.msra.mxu0 0.0
    %338 = vmatprep.subr.mxu0 0.0
    %339 = vmatpush1.msra.mxu0 0.0
    %340 = vmatprep.subr.mxu0 0.0
    %341 = vmatpush1.msra.mxu0 0.0
    %342 = vmatprep.subr.mxu0 0.0
    %343 = vmatpush1.msra.mxu0 0.0
    %344 = vmatprep.subr.mxu0 0.0
    %345 = vmatpush1.msra.mxu0 0.0
    %346 = vmatprep.subr.mxu0 0.0
    %347 = vmatpush1.msra.mxu0 0.0
    %348 = vmatprep.subr.mxu0 0.0
    %349 = vmatpush1.msra.mxu0 0.0
    %350 = vmatprep.subr.mxu0 0.0
    %351 = vmatpush1.msra.mxu0 0.0
    %352 = vmatprep.subr.mxu0 0.0
    %353 = vmatpush1.msra.mxu0 0.0
    %354 = vmatprep.subr.mxu0 0.0
    %355 = vmatpush1.msra.mxu0 0.0
    %356 = vmatprep.subr.mxu0 0.0
    %357 = vmatpush1.msra.mxu0 0.0
    %358 = vmatprep.subr.mxu0 0.0
    %359 = vmatpush1.msra.mxu0 0.0
    %360 = vmatprep.subr.mxu0 0.0
    %361 = vmatpush1.msra.mxu0 0.0
    %362 = vmatprep.subr.mxu0 0.0
    %363 = vmatpush1.msra.mxu0 0.0
    %364 = vmatprep.subr.mxu0 0.0
    %365 = vmatpush1.msra.mxu0 0.0
    %366 = vmatprep.subr.mxu0 0.0
    %367 = vmatpush1.msra.mxu0 0.0
    %368 = vmatprep.subr.mxu0 0.0
    %369 = vmatpush1.msra.mxu0 0.0
    %370 = vmatprep.subr.mxu0 0.0
    %371 = vmatpush1.msra.mxu0 0.0
    %372 = vmatprep.subr.mxu0 0.0
    %373 = vmatpush1.msra.mxu0 0.0
    %374 = vmatprep.subr.mxu0 0.0
    %375 = vmatpush1.msra.mxu0 0.0
    %376 = vmatprep.subr.mxu0 0.0
    %377 = vmatpush1.msra.mxu0 0.0
    %378 = vmatprep.subr.mxu0 0.0
    %379 = vmatpush1.msra.mxu0 0.0
    %380 = vmatprep.subr.mxu0 0.0
    %381 = vmatpush1.msra.mxu0 0.0
    %382 = vmatprep.subr.mxu0 0.0
    %383 = vmatpush1.msra.mxu0 0.0
    %384 = vmatprep.subr.mxu0 0.0
    %385 = vmatpush1.msra.mxu0 0.0
    %386 = vmatprep.subr.mxu0 0.0
    %387 = vmatpush1.msra.mxu0 0.0
    %388 = vmatprep.subr.mxu0 0.0
    %389 = vmatpush1.msra.mxu0 0.0
    %390 = vmatprep.subr.mxu0 0.0
    %391 = vmatpush1.msra.mxu0 0.0
    %392 = vmatprep.mubr.f32.mxu0 0.0
    %393 = vmatmul.mubr.f32.gmra.mrb[0].mxu0 %v326
    %v394 = vpop.f32.mrb[0].mxu0
    %v395 = vadd.f32 0.0, %v394
    %v396 = vpop.f32.mrb[0].mxu0
    %397 = vdwg.mxu0
    %398 = vrot.lane.b32.xlu0 %v142, 64
    %v399 = vpop.permute.xlu0 %398
    %v402 = vsel %vm148, %v321, 0
    %404 = vmatprep.subr.mxu0 0.0
    %405 = vmatpush1.msra.mxu0 %v399
    %406 = vmatprep.subr.mxu0 0.0
    %407 = vmatpush1.msra.mxu0 0.0
    %408 = vmatprep.subr.mxu0 0.0
    %409 = vmatpush1.msra.mxu0 0.0
    %410 = vmatprep.subr.mxu0 0.0
    %411 = vmatpush1.msra.mxu0 0.0
    %412 = vmatprep.subr.mxu0 0.0
    %413 = vmatpush1.msra.mxu0 0.0
    %414 = vmatprep.subr.mxu0 0.0
    %415 = vmatpush1.msra.mxu0 0.0
    %416 = vmatprep.subr.mxu0 0.0
    %417 = vmatpush1.msra.mxu0 0.0
    %418 = vmatprep.subr.mxu0 0.0
    %419 = vmatpush1.msra.mxu0 0.0
    %420 = vmatprep.subr.mxu0 0.0
    %421 = vmatpush1.msra.mxu0 0.0
    %422 = vmatprep.subr.mxu0 0.0
    %423 = vmatpush1.msra.mxu0 0.0
    %424 = vmatprep.subr.mxu0 0.0
    %425 = vmatpush1.msra.mxu0 0.0
    %426 = vmatprep.subr.mxu0 0.0
    %427 = vmatpush1.msra.mxu0 0.0
    %428 = vmatprep.subr.mxu0 0.0
    %429 = vmatpush1.msra.mxu0 0.0
    %430 = vmatprep.subr.mxu0 0.0
    %431 = vmatpush1.msra.mxu0 0.0
    %432 = vmatprep.subr.mxu0 0.0
    %433 = vmatpush1.msra.mxu0 0.0
    %434 = vmatprep.subr.mxu0 0.0
    %435 = vmatpush1.msra.mxu0 0.0
    %436 = vmatprep.subr.mxu0 0.0
    %437 = vmatpush1.msra.mxu0 0.0
    %438 = vmatprep.subr.mxu0 0.0
    %439 = vmatpush1.msra.mxu0 0.0
    %440 = vmatprep.subr.mxu0 0.0
    %441 = vmatpush1.msra.mxu0 0.0
    %442 = vmatprep.subr.mxu0 0.0
    %443 = vmatpush1.msra.mxu0 0.0
    %444 = vmatprep.subr.mxu0 0.0
    %445 = vmatpush1.msra.mxu0 0.0
    %446 = vmatprep.subr.mxu0 0.0
    %447 = vmatpush1.msra.mxu0 0.0
    %448 = vmatprep.subr.mxu0 0.0
    %449 = vmatpush1.msra.mxu0 0.0
    %450 = vmatprep.subr.mxu0 0.0
    %451 = vmatpush1.msra.mxu0 0.0
    %452 = vmatprep.subr.mxu0 0.0
    %453 = vmatpush1.msra.mxu0 0.0
    %454 = vmatprep.subr.mxu0 0.0
    %455 = vmatpush1.msra.mxu0 0.0
    %456 = vmatprep.subr.mxu0 0.0
    %457 = vmatpush1.msra.mxu0 0.0
    %458 = vmatprep.subr.mxu0 0.0
    %459 = vmatpush1.msra.mxu0 0.0
    %460 = vmatprep.subr.mxu0 0.0
    %461 = vmatpush1.msra.mxu0 0.0
    %462 = vmatprep.subr.mxu0 0.0
    %463 = vmatpush1.msra.mxu0 0.0
    %464 = vmatprep.subr.mxu0 0.0
    %465 = vmatpush1.msra.mxu0 0.0
    %466 = vmatprep.subr.mxu0 0.0
    %467 = vmatpush1.msra.mxu0 0.0
    %468 = vmatprep.mubr.f32.mxu0 0.0
    %469 = vmatmul.mubr.f32.gmra.mrb[0].mxu0 %v402
    %v470 = vpop.f32.mrb[0].mxu0
    %v471 = vadd.f32 0.0, %v470
    %v472 = vpop.f32.mrb[0].mxu0
    %473 = vdwg.mxu0
    %474 = vrot.lane.b32.xlu0 %v137, 120
    %v475 = vpop.permute.xlu0 %474
    %476 = vrot.lane.b32.xlu0 %v137, 88
    %v477 = vpop.permute.xlu0 %476
    %v478 = vsel %vm148, %v475, 0
    %v480 = vsel %vm148, %v477, 0
    %482 = vmatprep.subr.mxu0 0.0
    %483 = vmatpush1.xpose.msra.mxu0 %v480
    %484 = vmatprep.subr.mxu0 0.0
    %485 = vmatpush1.xpose.msra.mxu0 0.0
    %486 = vmatprep.subr.mxu0 0.0
    %487 = vmatpush1.xpose.msra.mxu0 0.0
    %488 = vmatprep.subr.mxu0 0.0
    %489 = vmatpush1.xpose.msra.mxu0 0.0
    %490 = vmatprep.subr.mxu0 0.0
    %491 = vmatpush1.xpose.msra.mxu0 0.0
    %492 = vmatprep.subr.mxu0 0.0
    %493 = vmatpush1.xpose.msra.mxu0 0.0
    %494 = vmatprep.subr.mxu0 0.0
    %495 = vmatpush1.xpose.msra.mxu0 0.0
    %496 = vmatprep.subr.mxu0 0.0
    %497 = vmatpush1.xpose.msra.mxu0 0.0
    %498 = vmatprep.subr.mxu0 0.0
    %499 = vmatpush1.xpose.msra.mxu0 0.0
    %500 = vmatprep.subr.mxu0 0.0
    %501 = vmatpush1.xpose.msra.mxu0 0.0
    %502 = vmatprep.subr.mxu0 0.0
    %503 = vmatpush1.xpose.msra.mxu0 0.0
    %504 = vmatprep.subr.mxu0 0.0
    %505 = vmatpush1.xpose.msra.mxu0 0.0
    %506 = vmatprep.subr.mxu0 0.0
    %507 = vmatpush1.xpose.msra.mxu0 0.0
    %508 = vmatprep.subr.mxu0 0.0
    %509 = vmatpush1.xpose.msra.mxu0 0.0
    %510 = vmatprep.subr.mxu0 0.0
    %511 = vmatpush1.xpose.msra.mxu0 0.0
    %512 = vmatprep.subr.mxu0 0.0
    %513 = vmatpush1.xpose.msra.mxu0 0.0
    %514 = vmatprep.subr.mxu0 0.0
    %515 = vmatpush1.xpose.msra.mxu0 0.0
    %516 = vmatprep.subr.mxu0 0.0
    %517 = vmatpush1.xpose.msra.mxu0 0.0
    %518 = vmatprep.subr.mxu0 0.0
    %519 = vmatpush1.xpose.msra.mxu0 0.0
    %520 = vmatprep.subr.mxu0 0.0
    %521 = vmatpush1.xpose.msra.mxu0 0.0
    %522 = vmatprep.subr.mxu0 0.0
    %523 = vmatpush1.xpose.msra.mxu0 0.0
    %524 = vmatprep.subr.mxu0 0.0
    %525 = vmatpush1.xpose.msra.mxu0 0.0
    %526 = vmatprep.subr.mxu0 0.0
    %527 = vmatpush1.xpose.msra.mxu0 0.0
    %528 = vmatprep.subr.mxu0 0.0
    %529 = vmatpush1.xpose.msra.mxu0 0.0
    %530 = vmatprep.subr.mxu0 0.0
    %531 = vmatpush1.xpose.msra.mxu0 0.0
    %532 = vmatprep.subr.mxu0 0.0
    %533 = vmatpush1.xpose.msra.mxu0 0.0
    %534 = vmatprep.subr.mxu0 0.0
    %535 = vmatpush1.xpose.msra.mxu0 0.0
    %536 = vmatprep.subr.mxu0 0.0
    %537 = vmatpush1.xpose.msra.mxu0 0.0
    %538 = vmatprep.subr.mxu0 0.0
    %539 = vmatpush1.xpose.msra.mxu0 0.0
    %540 = vmatprep.subr.mxu0 0.0
    %541 = vmatpush1.xpose.msra.mxu0 0.0
    %542 = vmatprep.subr.mxu0 0.0
    %543 = vmatpush1.xpose.msra.mxu0 0.0
    %544 = vmatprep.subr.mxu0 0.0
    %545 = vmatpush1.xpose.msra.mxu0 0.0
    %546 = vmatprep.mubr.f32.mxu0 0.0
    %547 = vmatmul.mubr.f32.gmra.mrb[0].mxu0 %v478
    %v548 = vpop.f32.mrb[0].mxu0
    %v549 = vadd.f32 0.0, %v548
    %v550 = vpop.f32.mrb[0].mxu0
    %551 = vdwg.mxu0
    %552 = vrot.lane.b32.xlu0 %v142, 120
    %v553 = vpop.permute.xlu0 %552
    %554 = vrot.lane.b32.xlu0 %v142, 88
    %v555 = vpop.permute.xlu0 %554
    %v556 = vsel %vm148, %v553, 0
    %v558 = vsel %vm148, %v555, 0
    %560 = vmatprep.subr.mxu0 0.0
    %561 = vmatpush1.xpose.msra.mxu0 %v558
    %562 = vmatprep.subr.mxu0 0.0
    %563 = vmatpush1.xpose.msra.mxu0 0.0
    %564 = vmatprep.subr.mxu0 0.0
    %565 = vmatpush1.xpose.msra.mxu0 0.0
    %566 = vmatprep.subr.mxu0 0.0
    %567 = vmatpush1.xpose.msra.mxu0 0.0
    %568 = vmatprep.subr.mxu0 0.0
    %569 = vmatpush1.xpose.msra.mxu0 0.0
    %570 = vmatprep.subr.mxu0 0.0
    %571 = vmatpush1.xpose.msra.mxu0 0.0
    %572 = vmatprep.subr.mxu0 0.0
    %573 = vmatpush1.xpose.msra.mxu0 0.0
    %574 = vmatprep.subr.mxu0 0.0
    %575 = vmatpush1.xpose.msra.mxu0 0.0
    %576 = vmatprep.subr.mxu0 0.0
    %577 = vmatpush1.xpose.msra.mxu0 0.0
    %578 = vmatprep.subr.mxu0 0.0
    %579 = vmatpush1.xpose.msra.mxu0 0.0
    %580 = vmatprep.subr.mxu0 0.0
    %581 = vmatpush1.xpose.msra.mxu0 0.0
    %582 = vmatprep.subr.mxu0 0.0
    %583 = vmatpush1.xpose.msra.mxu0 0.0
    %584 = vmatprep.subr.mxu0 0.0
    %585 = vmatpush1.xpose.msra.mxu0 0.0
    %586 = vmatprep.subr.mxu0 0.0
    %587 = vmatpush1.xpose.msra.mxu0 0.0
    %588 = vmatprep.subr.mxu0 0.0
    %589 = vmatpush1.xpose.msra.mxu0 0.0
    %590 = vmatprep.subr.mxu0 0.0
    %591 = vmatpush1.xpose.msra.mxu0 0.0
    %592 = vmatprep.subr.mxu0 0.0
    %593 = vmatpush1.xpose.msra.mxu0 0.0
    %594 = vmatprep.subr.mxu0 0.0
    %595 = vmatpush1.xpose.msra.mxu0 0.0
    %596 = vmatprep.subr.mxu0 0.0
    %597 = vmatpush1.xpose.msra.mxu0 0.0
    %598 = vmatprep.subr.mxu0 0.0
    %599 = vmatpush1.xpose.msra.mxu0 0.0
    %600 = vmatprep.subr.mxu0 0.0
    %601 = vmatpush1.xpose.msra.mxu0 0.0
    %602 = vmatprep.subr.mxu0 0.0
    %603 = vmatpush1.xpose.msra.mxu0 0.0
    %604 = vmatprep.subr.mxu0 0.0
    %605 = vmatpush1.xpose.msra.mxu0 0.0
    %606 = vmatprep.subr.mxu0 0.0
    %607 = vmatpush1.xpose.msra.mxu0 0.0
    %608 = vmatprep.subr.mxu0 0.0
    %609 = vmatpush1.xpose.msra.mxu0 0.0
    %610 = vmatprep.subr.mxu0 0.0
    %611 = vmatpush1.xpose.msra.mxu0 0.0
    %612 = vmatprep.subr.mxu0 0.0
    %613 = vmatpush1.xpose.msra.mxu0 0.0
    %614 = vmatprep.subr.mxu0 0.0
    %615 = vmatpush1.xpose.msra.mxu0 0.0
    %616 = vmatprep.subr.mxu0 0.0
    %617 = vmatpush1.xpose.msra.mxu0 0.0
    %618 = vmatprep.subr.mxu0 0.0
    %619 = vmatpush1.xpose.msra.mxu0 0.0
    %620 = vmatprep.subr.mxu0 0.0
    %621 = vmatpush1.xpose.msra.mxu0 0.0
    %622 = vmatprep.subr.mxu0 0.0
    %623 = vmatpush1.xpose.msra.mxu0 0.0
    %624 = vmatprep.mubr.f32.mxu0 0.0
    %625 = vmatmul.mubr.f32.gmra.mrb[0].mxu0 %v556
    %v626 = vpop.f32.mrb[0].mxu0
    %v627 = vadd.f32 0.0, %v626
    %v628 = vpop.f32.mrb[0].mxu0
    %629 = vdwg.mxu0
    %v630 = vsel %vm148, %v549, -inf
    %631 = vmax.xlane.f32.xlu0 %v630
    %v632 = vpop.xlane.xlu0 %631
    %v633 = vsel %vm148, %v627, -inf
    %634 = vmax.xlane.f32.xlu0 %v633
    %v635 = vpop.xlane.xlu0 %634
    %v636 = vsub.f32 %v549, %v632
    %v637 = vsub.f32 %v627, %v635
    %v638 = vmul.f32 %v636, 1.442695
    %v639 = vpow.pop %v638
    %v640 = vmul.f32 %v637, 1.442695
    %v641 = vpow.pop %v640
    %v642 = vsel %vm148, %v639, 0.0
    %643 = vadd.xlane.f32.xlu0 %v642
    %v644 = vpop.xlane.xlu0 %643
    %v645 = vsel %vm148, %v641, 0.0
    %646 = vadd.xlane.f32.xlu0 %v645
    %v647 = vpop.xlane.xlu0 %646
    %v648 = vrcp.pop %v644
    %v649 = vmul.f32 %v639, %v648
    %v650 = vrcp.pop %v647
    %v651 = vmul.f32 %v641, %v650
    %652 = vrot.lane.b32.xlu0 %v137, 56
    %v653 = vpop.permute.xlu0 %652
    %v656 = vsel %vm148, %v649, 0
    %658 = vmatprep.subr.mxu0 0.0
    %659 = vmatpush1.msra.mxu0 %v653
    %660 = vmatprep.subr.mxu0 0.0
    %661 = vmatpush1.msra.mxu0 0.0
    %662 = vmatprep.subr.mxu0 0.0
    %663 = vmatpush1.msra.mxu0 0.0
    %664 = vmatprep.subr.mxu0 0.0
    %665 = vmatpush1.msra.mxu0 0.0
    %666 = vmatprep.subr.mxu0 0.0
    %667 = vmatpush1.msra.mxu0 0.0
    %668 = vmatprep.subr.mxu0 0.0
    %669 = vmatpush1.msra.mxu0 0.0
    %670 = vmatprep.subr.mxu0 0.0
    %671 = vmatpush1.msra.mxu0 0.0
    %672 = vmatprep.subr.mxu0 0.0
    %673 = vmatpush1.msra.mxu0 0.0
    %674 = vmatprep.subr.mxu0 0.0
    %675 = vmatpush1.msra.mxu0 0.0
    %676 = vmatprep.subr.mxu0 0.0
    %677 = vmatpush1.msra.mxu0 0.0
    %678 = vmatprep.subr.mxu0 0.0
    %679 = vmatpush1.msra.mxu0 0.0
    %680 = vmatprep.subr.mxu0 0.0
    %681 = vmatpush1.msra.mxu0 0.0
    %682 = vmatprep.subr.mxu0 0.0
    %683 = vmatpush1.msra.mxu0 0.0
    %684 = vmatprep.subr.mxu0 0.0
    %685 = vmatpush1.msra.mxu0 0.0
    %686 = vmatprep.subr.mxu0 0.0
    %687 = vmatpush1.msra.mxu0 0.0
    %688 = vmatprep.subr.mxu0 0.0
    %689 = vmatpush1.msra.mxu0 0.0
    %690 = vmatprep.subr.mxu0 0.0
    %691 = vmatpush1.msra.mxu0 0.0
    %692 = vmatprep.subr.mxu0 0.0
    %693 = vmatpush1.msra.mxu0 0.0
    %694 = vmatprep.subr.mxu0 0.0
    %695 = vmatpush1.msra.mxu0 0.0
    %696 = vmatprep.subr.mxu0 0.0
    %697 = vmatpush1.msra.mxu0 0.0
    %698 = vmatprep.subr.mxu0 0.0
    %699 = vmatpush1.msra.mxu0 0.0
    %700 = vmatprep.subr.mxu0 0.0
    %701 = vmatpush1.msra.mxu0 0.0
    %702 = vmatprep.subr.mxu0 0.0
    %703 = vmatpush1.msra.mxu0 0.0
    %704 = vmatprep.subr.mxu0 0.0
    %705 = vmatpush1.msra.mxu0 0.0
    %706 = vmatprep.subr.mxu0 0.0
    %707 = vmatpush1.msra.mxu0 0.0
    %708 = vmatprep.subr.mxu0 0.0
    %709 = vmatpush1.msra.mxu0 0.0
    %710 = vmatprep.subr.mxu0 0.0
    %711 = vmatpush1.msra.mxu0 0.0
    %712 = vmatprep.subr.mxu0 0.0
    %713 = vmatpush1.msra.mxu0 0.0
    %714 = vmatprep.subr.mxu0 0.0
    %715 = vmatpush1.msra.mxu0 0.0
    %716 = vmatprep.subr.mxu0 0.0
    %717 = vmatpush1.msra.mxu0 0.0
    %718 = vmatprep.subr.mxu0 0.0
    %719 = vmatpush1.msra.mxu0 0.0
    %720 = vmatprep.subr.mxu0 0.0
    %721 = vmatpush1.msra.mxu0 0.0
    %722 = vmatprep.mubr.f32.mxu0 0.0
    %723 = vmatmul.mubr.f32.gmra.mrb[0].mxu0 %v656
    %v724 = vpop.f32.mrb[0].mxu0
    %v725 = vadd.f32 0.0, %v724
    %v726 = vpop.f32.mrb[0].mxu0
    %727 = vdwg.mxu0
    %728 = vrot.lane.b32.xlu0 %v142, 56
    %v729 = vpop.permute.xlu0 %728
    %v732 = vsel %vm148, %v651, 0
    %734 = vmatprep.subr.mxu0 0.0
    %735 = vmatpush1.msra.mxu0 %v729
    %736 = vmatprep.subr.mxu0 0.0
    %737 = vmatpush1.msra.mxu0 0.0
    %738 = vmatprep.subr.mxu0 0.0
    %739 = vmatpush1.msra.mxu0 0.0
    %740 = vmatprep.subr.mxu0 0.0
    %741 = vmatpush1.msra.mxu0 0.0
    %742 = vmatprep.subr.mxu0 0.0
    %743 = vmatpush1.msra.mxu0 0.0
    %744 = vmatprep.subr.mxu0 0.0
    %745 = vmatpush1.msra.mxu0 0.0
    %746 = vmatprep.subr.mxu0 0.0
    %747 = vmatpush1.msra.mxu0 0.0
    %748 = vmatprep.subr.mxu0 0.0
    %749 = vmatpush1.msra.mxu0 0.0
    %750 = vmatprep.subr.mxu0 0.0
    %751 = vmatpush1.msra.mxu0 0.0
    %752 = vmatprep.subr.mxu0 0.0
    %753 = vmatpush1.msra.mxu0 0.0
    %754 = vmatprep.subr.mxu0 0.0
    %755 = vmatpush1.msra.mxu0 0.0
    %756 = vmatprep.subr.mxu0 0.0
    %757 = vmatpush1.msra.mxu0 0.0
    %758 = vmatprep.subr.mxu0 0.0
    %759 = vmatpush1.msra.mxu0 0.0
    %760 = vmatprep.subr.mxu0 0.0
    %761 = vmatpush1.msra.mxu0 0.0
    %762 = vmatprep.subr.mxu0 0.0
    %763 = vmatpush1.msra.mxu0 0.0
    %764 = vmatprep.subr.mxu0 0.0
    %765 = vmatpush1.msra.mxu0 0.0
    %766 = vmatprep.subr.mxu0 0.0
    %767 = vmatpush1.msra.mxu0 0.0
    %768 = vmatprep.subr.mxu0 0.0
    %769 = vmatpush1.msra.mxu0 0.0
    %770 = vmatprep.subr.mxu0 0.0
    %771 = vmatpush1.msra.mxu0 0.0
    %772 = vmatprep.subr.mxu0 0.0
    %773 = vmatpush1.msra.mxu0 0.0
    %774 = vmatprep.subr.mxu0 0.0
    %775 = vmatpush1.msra.mxu0 0.0
    %776 = vmatprep.subr.mxu0 0.0
    %777 = vmatpush1.msra.mxu0 0.0
    %778 = vmatprep.subr.mxu0 0.0
    %779 = vmatpush1.msra.mxu0 0.0
    %780 = vmatprep.subr.mxu0 0.0
    %781 = vmatpush1.msra.mxu0 0.0
    %782 = vmatprep.subr.mxu0 0.0
    %783 = vmatpush1.msra.mxu0 0.0
    %784 = vmatprep.subr.mxu0 0.0
    %785 = vmatpush1.msra.mxu0 0.0
    %786 = vmatprep.subr.mxu0 0.0
    %787 = vmatpush1.msra.mxu0 0.0
    %788 = vmatprep.subr.mxu0 0.0
    %789 = vmatpush1.msra.mxu0 0.0
    %790 = vmatprep.subr.mxu0 0.0
    %791 = vmatpush1.msra.mxu0 0.0
    %792 = vmatprep.subr.mxu0 0.0
    %793 = vmatpush1.msra.mxu0 0.0
    %794 = vmatprep.subr.mxu0 0.0
    %795 = vmatpush1.msra.mxu0 0.0
    %796 = vmatprep.subr.mxu0 0.0
    %797 = vmatpush1.msra.mxu0 0.0
    %798 = vmatprep.mubr.f32.mxu0 0.0
    %799 = vmatmul.mubr.f32.gmra.mrb[0].mxu0 %v732
    %v800 = vpop.f32.mrb[0].mxu0
    %v801 = vadd.f32 0.0, %v800
    %v802 = vpop.f32.mrb[0].mxu0
    %803 = vdwg.mxu0
    %804 = vrot.lane.b32.xlu0 %v137, 112
    %v805 = vpop.permute.xlu0 %804
    %806 = vrot.lane.b32.xlu0 %v137, 80
    %v807 = vpop.permute.xlu0 %806
    %v808 = vsel %vm148, %v805, 0
    %v810 = vsel %vm148, %v807, 0
    %812 = vmatprep.subr.mxu0 0.0
    %813 = vmatpush1.xpose.msra.mxu0 %v810
    %814 = vmatprep.subr.mxu0 0.0
    %815 = vmatpush1.xpose.msra.mxu0 0.0
    %816 = vmatprep.subr.mxu0 0.0
    %817 = vmatpush1.xpose.msra.mxu0 0.0
    %818 = vmatprep.subr.mxu0 0.0
    %819 = vmatpush1.xpose.msra.mxu0 0.0
    %820 = vmatprep.subr.mxu0 0.0
    %821 = vmatpush1.xpose.msra.mxu0 0.0
    %822 = vmatprep.subr.mxu0 0.0
    %823 = vmatpush1.xpose.msra.mxu0 0.0
    %824 = vmatprep.subr.mxu0 0.0
    %825 = vmatpush1.xpose.msra.mxu0 0.0
    %826 = vmatprep.subr.mxu0 0.0
    %827 = vmatpush1.xpose.msra.mxu0 0.0
    %828 = vmatprep.subr.mxu0 0.0
    %829 = vmatpush1.xpose.msra.mxu0 0.0
    %830 = vmatprep.subr.mxu0 0.0
    %831 = vmatpush1.xpose.msra.mxu0 0.0
    %832 = vmatprep.subr.mxu0 0.0
    %833 = vmatpush1.xpose.msra.mxu0 0.0
    %834 = vmatprep.subr.mxu0 0.0
    %835 = vmatpush1.xpose.msra.mxu0 0.0
    %836 = vmatprep.subr.mxu0 0.0
    %837 = vmatpush1.xpose.msra.mxu0 0.0
    %838 = vmatprep.subr.mxu0 0.0
    %839 = vmatpush1.xpose.msra.mxu0 0.0
    %840 = vmatprep.subr.mxu0 0.0
    %841 = vmatpush1.xpose.msra.mxu0 0.0
    %842 = vmatprep.subr.mxu0 0.0
    %843 = vmatpush1.xpose.msra.mxu0 0.0
    %844 = vmatprep.subr.mxu0 0.0
    %845 = vmatpush1.xpose.msra.mxu0 0.0
    %846 = vmatprep.subr.mxu0 0.0
    %847 = vmatpush1.xpose.msra.mxu0 0.0
    %848 = vmatprep.subr.mxu0 0.0
    %849 = vmatpush1.xpose.msra.mxu0 0.0
    %850 = vmatprep.subr.mxu0 0.0
    %851 = vmatpush1.xpose.msra.mxu0 0.0
    %852 = vmatprep.subr.mxu0 0.0
    %853 = vmatpush1.xpose.msra.mxu0 0.0
    %854 = vmatprep.subr.mxu0 0.0
    %855 = vmatpush1.xpose.msra.mxu0 0.0
    %856 = vmatprep.subr.mxu0 0.0
    %857 = vmatpush1.xpose.msra.mxu0 0.0
    %858 = vmatprep.subr.mxu0 0.0
    %859 = vmatpush1.xpose.msra.mxu0 0.0
    %860 = vmatprep.subr.mxu0 0.0
    %861 = vmatpush1.xpose.msra.mxu0 0.0
    %862 = vmatprep.subr.mxu0 0.0
    %863 = vmatpush1.xpose.msra.mxu0 0.0
    %864 = vmatprep.subr.mxu0 0.0
    %865 = vmatpush1.xpose.msra.mxu0 0.0
    %866 = vmatprep.subr.mxu0 0.0
    %867 = vmatpush1.xpose.msra.mxu0 0.0
    %868 = vmatprep.subr.mxu0 0.0
    %869 = vmatpush1.xpose.msra.mxu0 0.0
    %870 = vmatprep.subr.mxu0 0.0
    %871 = vmatpush1.xpose.msra.mxu0 0.0
    %872 = vmatprep.subr.mxu0 0.0
    %873 = vmatpush1.xpose.msra.mxu0 0.0
    %874 = vmatprep.subr.mxu0 0.0
    %875 = vmatpush1.xpose.msra.mxu0 0.0
    %876 = vmatprep.mubr.f32.mxu0 0.0
    %877 = vmatmul.mubr.f32.gmra.mrb[0].mxu0 %v808
    %v878 = vpop.f32.mrb[0].mxu0
    %v879 = vadd.f32 0.0, %v878
    %v880 = vpop.f32.mrb[0].mxu0
    %881 = vdwg.mxu0
    %882 = vrot.lane.b32.xlu0 %v142, 112
    %v883 = vpop.permute.xlu0 %882
    %884 = vrot.lane.b32.xlu0 %v142, 80
    %v885 = vpop.permute.xlu0 %884
    %v886 = vsel %vm148, %v883, 0
    %v888 = vsel %vm148, %v885, 0
    %890 = vmatprep.subr.mxu0 0.0
    %891 = vmatpush1.xpose.msra.mxu0 %v888
    %892 = vmatprep.subr.mxu0 0.0
    %893 = vmatpush1.xpose.msra.mxu0 0.0
    %894 = vmatprep.subr.mxu0 0.0
    %895 = vmatpush1.xpose.msra.mxu0 0.0
    %896 = vmatprep.subr.mxu0 0.0
    %897 = vmatpush1.xpose.msra.mxu0 0.0
    %898 = vmatprep.subr.mxu0 0.0
    %899 = vmatpush1.xpose.msra.mxu0 0.0
    %900 = vmatprep.subr.mxu0 0.0
    %901 = vmatpush1.xpose.msra.mxu0 0.0
    %902 = vmatprep.subr.mxu0 0.0
    %903 = vmatpush1.xpose.msra.mxu0 0.0
    %904 = vmatprep.subr.mxu0 0.0
    %905 = vmatpush1.xpose.msra.mxu0 0.0
    %906 = vmatprep.subr.mxu0 0.0
    %907 = vmatpush1.xpose.msra.mxu0 0.0
    %908 = vmatprep.subr.mxu0 0.0
    %909 = vmatpush1.xpose.msra.mxu0 0.0
    %910 = vmatprep.subr.mxu0 0.0
    %911 = vmatpush1.xpose.msra.mxu0 0.0
    %912 = vmatprep.subr.mxu0 0.0
    %913 = vmatpush1.xpose.msra.mxu0 0.0
    %914 = vmatprep.subr.mxu0 0.0
    %915 = vmatpush1.xpose.msra.mxu0 0.0
    %916 = vmatprep.subr.mxu0 0.0
    %917 = vmatpush1.xpose.msra.mxu0 0.0
    %918 = vmatprep.subr.mxu0 0.0
    %919 = vmatpush1.xpose.msra.mxu0 0.0
    %920 = vmatprep.subr.mxu0 0.0
    %921 = vmatpush1.xpose.msra.mxu0 0.0
    %922 = vmatprep.subr.mxu0 0.0
    %923 = vmatpush1.xpose.msra.mxu0 0.0
    %924 = vmatprep.subr.mxu0 0.0
    %925 = vmatpush1.xpose.msra.mxu0 0.0
    %926 = vmatprep.subr.mxu0 0.0
    %927 = vmatpush1.xpose.msra.mxu0 0.0
    %928 = vmatprep.subr.mxu0 0.0
    %929 = vmatpush1.xpose.msra.mxu0 0.0
    %930 = vmatprep.subr.mxu0 0.0
    %931 = vmatpush1.xpose.msra.mxu0 0.0
    %932 = vmatprep.subr.mxu0 0.0
    %933 = vmatpush1.xpose.msra.mxu0 0.0
    %934 = vmatprep.subr.mxu0 0.0
    %935 = vmatpush1.xpose.msra.mxu0 0.0
    %936 = vmatprep.subr.mxu0 0.0
    %937 = vmatpush1.xpose.msra.mxu0 0.0
    %938 = vmatprep.subr.mxu0 0.0
    %939 = vmatpush1.xpose.msra.mxu0 0.0
    %940 = vmatprep.subr.mxu0 0.0
    %941 = vmatpush1.xpose.msra.mxu0 0.0
    %942 = vmatprep.subr.mxu0 0.0
    %943 = vmatpush1.xpose.msra.mxu0 0.0
    %944 = vmatprep.subr.mxu0 0.0
    %945 = vmatpush1.xpose.msra.mxu0 0.0
    %946 = vmatprep.subr.mxu0 0.0
    %947 = vmatpush1.xpose.msra.mxu0 0.0
    %948 = vmatprep.subr.mxu0 0.0
    %949 = vmatpush1.xpose.msra.mxu0 0.0
    %950 = vmatprep.subr.mxu0 0.0
    %951 = vmatpush1.xpose.msra.mxu0 0.0
    %952 = vmatprep.subr.mxu0 0.0
    %953 = vmatpush1.xpose.msra.mxu0 0.0
    %954 = vmatprep.mubr.f32.mxu0 0.0
    %955 = vmatmul.mubr.f32.gmra.mrb[0].mxu0 %v886
    %v956 = vpop.f32.mrb[0].mxu0
    %v957 = vadd.f32 0.0, %v956
    %v958 = vpop.f32.mrb[0].mxu0
    %959 = vdwg.mxu0
    %v960 = vsel %vm148, %v879, -inf
    %961 = vmax.xlane.f32.xlu0 %v960
    %v962 = vpop.xlane.xlu0 %961
    %v963 = vsel %vm148, %v957, -inf
    %964 = vmax.xlane.f32.xlu0 %v963
    %v965 = vpop.xlane.xlu0 %964
    %v966 = vsub.f32 %v879, %v962
    %v967 = vsub.f32 %v957, %v965
    %v968 = vmul.f32 %v966, 1.442695
    %v969 = vpow.pop %v968
    %v970 = vmul.f32 %v967, 1.442695
    %v971 = vpow.pop %v970
    %v972 = vsel %vm148, %v969, 0.0
    %973 = vadd.xlane.f32.xlu0 %v972
    %v974 = vpop.xlane.xlu0 %973
    %v975 = vsel %vm148, %v971, 0.0
    %976 = vadd.xlane.f32.xlu0 %v975
    %v977 = vpop.xlane.xlu0 %976
    %v978 = vrcp.pop %v974
    %v979 = vmul.f32 %v969, %v978
    %v980 = vrcp.pop %v977
    %v981 = vmul.f32 %v971, %v980
    %982 = vrot.lane.b32.xlu0 %v137, 48
    %v983 = vpop.permute.xlu0 %982
    %v986 = vsel %vm148, %v979, 0
    %988 = vmatprep.subr.mxu0 0.0
    %989 = vmatpush1.msra.mxu0 %v983
    %990 = vmatprep.subr.mxu0 0.0
    %991 = vmatpush1.msra.mxu0 0.0
    %992 = vmatprep.subr.mxu0 0.0
    %993 = vmatpush1.msra.mxu0 0.0
    %994 = vmatprep.subr.mxu0 0.0
    %995 = vmatpush1.msra.mxu0 0.0
    %996 = vmatprep.subr.mxu0 0.0
    %997 = vmatpush1.msra.mxu0 0.0
    %998 = vmatprep.subr.mxu0 0.0
    %999 = vmatpush1.msra.mxu0 0.0
    %1000 = vmatprep.subr.mxu0 0.0
    %1001 = vmatpush1.msra.mxu0 0.0
    %1002 = vmatprep.subr.mxu0 0.0
    %1003 = vmatpush1.msra.mxu0 0.0
    %1004 = vmatprep.subr.mxu0 0.0
    %1005 = vmatpush1.msra.mxu0 0.0
    %1006 = vmatprep.subr.mxu0 0.0
    %1007 = vmatpush1.msra.mxu0 0.0
    %1008 = vmatprep.subr.mxu0 0.0
    %1009 = vmatpush1.msra.mxu0 0.0
    %1010 = vmatprep.subr.mxu0 0.0
    %1011 = vmatpush1.msra.mxu0 0.0
    %1012 = vmatprep.subr.mxu0 0.0
    %1013 = vmatpush1.msra.mxu0 0.0
    %1014 = vmatprep.subr.mxu0 0.0
    %1015 = vmatpush1.msra.mxu0 0.0
    %1016 = vmatprep.subr.mxu0 0.0
    %1017 = vmatpush1.msra.mxu0 0.0
    %1018 = vmatprep.subr.mxu0 0.0
    %1019 = vmatpush1.msra.mxu0 0.0
    %1020 = vmatprep.subr.mxu0 0.0
    %1021 = vmatpush1.msra.mxu0 0.0
    %1022 = vmatprep.subr.mxu0 0.0
    %1023 = vmatpush1.msra.mxu0 0.0
    %1024 = vmatprep.subr.mxu0 0.0
    %1025 = vmatpush1.msra.mxu0 0.0
    %1026 = vmatprep.subr.mxu0 0.0
    %1027 = vmatpush1.msra.mxu0 0.0
    %1028 = vmatprep.subr.mxu0 0.0
    %1029 = vmatpush1.msra.mxu0 0.0
    %1030 = vmatprep.subr.mxu0 0.0
    %1031 = vmatpush1.msra.mxu0 0.0
    %1032 = vmatprep.subr.mxu0 0.0
    %1033 = vmatpush1.msra.mxu0 0.0
    %1034 = vmatprep.subr.mxu0 0.0
    %1035 = vmatpush1.msra.mxu0 0.0
    %1036 = vmatprep.subr.mxu0 0.0
    %1037 = vmatpush1.msra.mxu0 0.0
    %1038 = vmatprep.subr.mxu0 0.0
    %1039 = vmatpush1.msra.mxu0 0.0
    %1040 = vmatprep.subr.mxu0 0.0
    %1041 = vmatpush1.msra.mxu0 0.0
    %1042 = vmatprep.subr.mxu0 0.0
    %1043 = vmatpush1.msra.mxu0 0.0
    %1044 = vmatprep.subr.mxu0 0.0
    %1045 = vmatpush1.msra.mxu0 0.0
    %1046 = vmatprep.subr.mxu0 0.0
    %1047 = vmatpush1.msra.mxu0 0.0
    %1048 = vmatprep.subr.mxu0 0.0
    %1049 = vmatpush1.msra.mxu0 0.0
    %1050 = vmatprep.subr.mxu0 0.0
    %1051 = vmatpush1.msra.mxu0 0.0
    %1052 = vmatprep.mubr.f32.mxu0 0.0
    %1053 = vmatmul.mubr.f32.gmra.mrb[0].mxu0 %v986
    %v1054 = vpop.f32.mrb[0].mxu0
    %v1055 = vadd.f32 0.0, %v1054
    %v1056 = vpop.f32.mrb[0].mxu0
    %1057 = vdwg.mxu0
    %1058 = vrot.lane.b32.xlu0 %v142, 48
    %v1059 = vpop.permute.xlu0 %1058
    %v1062 = vsel %vm148, %v981, 0
    %1064 = vmatprep.subr.mxu0 0.0
    %1065 = vmatpush1.msra.mxu0 %v1059
    %1066 = vmatprep.subr.mxu0 0.0
    %1067 = vmatpush1.msra.mxu0 0.0
    %1068 = vmatprep.subr.mxu0 0.0
    %1069 = vmatpush1.msra.mxu0 0.0
    %1070 = vmatprep.subr.mxu0 0.0
    %1071 = vmatpush1.msra.mxu0 0.0
    %1072 = vmatprep.subr.mxu0 0.0
    %1073 = vmatpush1.msra.mxu0 0.0
    %1074 = vmatprep.subr.mxu0 0.0
    %1075 = vmatpush1.msra.mxu0 0.0
    %1076 = vmatprep.subr.mxu0 0.0
    %1077 = vmatpush1.msra.mxu0 0.0
    %1078 = vmatprep.subr.mxu0 0.0
    %1079 = vmatpush1.msra.mxu0 0.0
    %1080 = vmatprep.subr.mxu0 0.0
    %1081 = vmatpush1.msra.mxu0 0.0
    %1082 = vmatprep.subr.mxu0 0.0
    %1083 = vmatpush1.msra.mxu0 0.0
    %1084 = vmatprep.subr.mxu0 0.0
    %1085 = vmatpush1.msra.mxu0 0.0
    %1086 = vmatprep.subr.mxu0 0.0
    %1087 = vmatpush1.msra.mxu0 0.0
    %1088 = vmatprep.subr.mxu0 0.0
    %1089 = vmatpush1.msra.mxu0 0.0
    %1090 = vmatprep.subr.mxu0 0.0
    %1091 = vmatpush1.msra.mxu0 0.0
    %1092 = vmatprep.subr.mxu0 0.0
    %1093 = vmatpush1.msra.mxu0 0.0
    %1094 = vmatprep.subr.mxu0 0.0
    %1095 = vmatpush1.msra.mxu0 0.0
    %1096 = vmatprep.subr.mxu0 0.0
    %1097 = vmatpush1.msra.mxu0 0.0
    %1098 = vmatprep.subr.mxu0 0.0
    %1099 = vmatpush1.msra.mxu0 0.0
    %1100 = vmatprep.subr.mxu0 0.0
    %1101 = vmatpush1.msra.mxu0 0.0
    %1102 = vmatprep.subr.mxu0 0.0
    %1103 = vmatpush1.msra.mxu0 0.0
    %1104 = vmatprep.subr.mxu0 0.0
    %1105 = vmatpush1.msra.mxu0 0.0
    %1106 = vmatprep.subr.mxu0 0.0
    %1107 = vmatpush1.msra.mxu0 0.0
    %1108 = vmatprep.subr.mxu0 0.0
    %1109 = vmatpush1.msra.mxu0 0.0
    %1110 = vmatprep.subr.mxu0 0.0
    %1111 = vmatpush1.msra.mxu0 0.0
    %1112 = vmatprep.subr.mxu0 0.0
    %1113 = vmatpush1.msra.mxu0 0.0
    %1114 = vmatprep.subr.mxu0 0.0
    %1115 = vmatpush1.msra.mxu0 0.0
    %1116 = vmatprep.subr.mxu0 0.0
    %1117 = vmatpush1.msra.mxu0 0.0
    %1118 = vmatprep.subr.mxu0 0.0
    %1119 = vmatpush1.msra.mxu0 0.0
    %1120 = vmatprep.subr.mxu0 0.0
    %1121 = vmatpush1.msra.mxu0 0.0
    %1122 = vmatprep.subr.mxu0 0.0
    %1123 = vmatpush1.msra.mxu0 0.0
    %1124 = vmatprep.subr.mxu0 0.0
    %1125 = vmatpush1.msra.mxu0 0.0
    %1126 = vmatprep.subr.mxu0 0.0
    %1127 = vmatpush1.msra.mxu0 0.0
    %1128 = vmatprep.mubr.f32.mxu0 0.0
    %1129 = vmatmul.mubr.f32.gmra.mrb[0].mxu0 %v1062
    %v1130 = vpop.f32.mrb[0].mxu0
    %v1131 = vadd.f32 0.0, %v1130
    %v1132 = vpop.f32.mrb[0].mxu0
    %1133 = vdwg.mxu0
    %1134 = vrot.lane.b32.xlu0 %v137, 104
    %v1135 = vpop.permute.xlu0 %1134
    %1136 = vrot.lane.b32.xlu0 %v137, 72
    %v1137 = vpop.permute.xlu0 %1136
    %v1138 = vsel %vm148, %v1135, 0
    %v1140 = vsel %vm148, %v1137, 0
    %1142 = vmatprep.subr.mxu0 0.0
    %1143 = vmatpush1.xpose.msra.mxu0 %v1140
    %1144 = vmatprep.subr.mxu0 0.0
    %1145 = vmatpush1.xpose.msra.mxu0 0.0
    %1146 = vmatprep.subr.mxu0 0.0
    %1147 = vmatpush1.xpose.msra.mxu0 0.0
    %1148 = vmatprep.subr.mxu0 0.0
    %1149 = vmatpush1.xpose.msra.mxu0 0.0
    %1150 = vmatprep.subr.mxu0 0.0
    %1151 = vmatpush1.xpose.msra.mxu0 0.0
    %1152 = vmatprep.subr.mxu0 0.0
    %1153 = vmatpush1.xpose.msra.mxu0 0.0
    %1154 = vmatprep.subr.mxu0 0.0
    %1155 = vmatpush1.xpose.msra.mxu0 0.0
    %1156 = vmatprep.subr.mxu0 0.0
    %1157 = vmatpush1.xpose.msra.mxu0 0.0
    %1158 = vmatprep.subr.mxu0 0.0
    %1159 = vmatpush1.xpose.msra.mxu0 0.0
    %1160 = vmatprep.subr.mxu0 0.0
    %1161 = vmatpush1.xpose.msra.mxu0 0.0
    %1162 = vmatprep.subr.mxu0 0.0
    %1163 = vmatpush1.xpose.msra.mxu0 0.0
    %1164 = vmatprep.subr.mxu0 0.0
    %1165 = vmatpush1.xpose.msra.mxu0 0.0
    %1166 = vmatprep.subr.mxu0 0.0
    %1167 = vmatpush1.xpose.msra.mxu0 0.0
    %1168 = vmatprep.subr.mxu0 0.0
    %1169 = vmatpush1.xpose.msra.mxu0 0.0
    %1170 = vmatprep.subr.mxu0 0.0
    %1171 = vmatpush1.xpose.msra.mxu0 0.0
    %1172 = vmatprep.subr.mxu0 0.0
    %1173 = vmatpush1.xpose.msra.mxu0 0.0
    %1174 = vmatprep.subr.mxu0 0.0
    %1175 = vmatpush1.xpose.msra.mxu0 0.0
    %1176 = vmatprep.subr.mxu0 0.0
    %1177 = vmatpush1.xpose.msra.mxu0 0.0
    %1178 = vmatprep.subr.mxu0 0.0
    %1179 = vmatpush1.xpose.msra.mxu0 0.0
    %1180 = vmatprep.subr.mxu0 0.0
    %1181 = vmatpush1.xpose.msra.mxu0 0.0
    %1182 = vmatprep.subr.mxu0 0.0
    %1183 = vmatpush1.xpose.msra.mxu0 0.0
    %1184 = vmatprep.subr.mxu0 0.0
    %1185 = vmatpush1.xpose.msra.mxu0 0.0
    %1186 = vmatprep.subr.mxu0 0.0
    %1187 = vmatpush1.xpose.msra.mxu0 0.0
    %1188 = vmatprep.subr.mxu0 0.0
    %1189 = vmatpush1.xpose.msra.mxu0 0.0
    %1190 = vmatprep.subr.mxu0 0.0
    %1191 = vmatpush1.xpose.msra.mxu0 0.0
    %1192 = vmatprep.subr.mxu0 0.0
    %1193 = vmatpush1.xpose.msra.mxu0 0.0
    %1194 = vmatprep.subr.mxu0 0.0
    %1195 = vmatpush1.xpose.msra.mxu0 0.0
    %1196 = vmatprep.subr.mxu0 0.0
    %1197 = vmatpush1.xpose.msra.mxu0 0.0
    %1198 = vmatprep.subr.mxu0 0.0
    %1199 = vmatpush1.xpose.msra.mxu0 0.0
    %1200 = vmatprep.subr.mxu0 0.0
    %1201 = vmatpush1.xpose.msra.mxu0 0.0
    %1202 = vmatprep.subr.mxu0 0.0
    %1203 = vmatpush1.xpose.msra.mxu0 0.0
    %1204 = vmatprep.subr.mxu0 0.0
    %1205 = vmatpush1.xpose.msra.mxu0 0.0
    %1206 = vmatprep.mubr.f32.mxu0 0.0
    %1207 = vmatmul.mubr.f32.gmra.mrb[0].mxu0 %v1138
    %v1208 = vpop.f32.mrb[0].mxu0
    %v1209 = vadd.f32 0.0, %v1208
    %v1210 = vpop.f32.mrb[0].mxu0
    %1211 = vdwg.mxu0
    %1212 = vrot.lane.b32.xlu0 %v142, 104
    %v1213 = vpop.permute.xlu0 %1212
    %1214 = vrot.lane.b32.xlu0 %v142, 72
    %v1215 = vpop.permute.xlu0 %1214
    %v1216 = vsel %vm148, %v1213, 0
    %v1218 = vsel %vm148, %v1215, 0
    %1220 = vmatprep.subr.mxu0 0.0
    %1221 = vmatpush1.xpose.msra.mxu0 %v1218
    %1222 = vmatprep.subr.mxu0 0.0
    %1223 = vmatpush1.xpose.msra.mxu0 0.0
    %1224 = vmatprep.subr.mxu0 0.0
    %1225 = vmatpush1.xpose.msra.mxu0 0.0
    %1226 = vmatprep.subr.mxu0 0.0
    %1227 = vmatpush1.xpose.msra.mxu0 0.0
    %1228 = vmatprep.subr.mxu0 0.0
    %1229 = vmatpush1.xpose.msra.mxu0 0.0
    %1230 = vmatprep.subr.mxu0 0.0
    %1231 = vmatpush1.xpose.msra.mxu0 0.0
    %1232 = vmatprep.subr.mxu0 0.0
    %1233 = vmatpush1.xpose.msra.mxu0 0.0
    %1234 = vmatprep.subr.mxu0 0.0
    %1235 = vmatpush1.xpose.msra.mxu0 0.0
    %1236 = vmatprep.subr.mxu0 0.0
    %1237 = vmatpush1.xpose.msra.mxu0 0.0
    %1238 = vmatprep.subr.mxu0 0.0
    %1239 = vmatpush1.xpose.msra.mxu0 0.0
    %1240 = vmatprep.subr.mxu0 0.0
    %1241 = vmatpush1.xpose.msra.mxu0 0.0
    %1242 = vmatprep.subr.mxu0 0.0
    %1243 = vmatpush1.xpose.msra.mxu0 0.0
    %1244 = vmatprep.subr.mxu0 0.0
    %1245 = vmatpush1.xpose.msra.mxu0 0.0
    %1246 = vmatprep.subr.mxu0 0.0
    %1247 = vmatpush1.xpose.msra.mxu0 0.0
    %1248 = vmatprep.subr.mxu0 0.0
    %1249 = vmatpush1.xpose.msra.mxu0 0.0
    %1250 = vmatprep.subr.mxu0 0.0
    %1251 = vmatpush1.xpose.msra.mxu0 0.0
    %1252 = vmatprep.subr.mxu0 0.0
    %1253 = vmatpush1.xpose.msra.mxu0 0.0
    %1254 = vmatprep.subr.mxu0 0.0
    %1255 = vmatpush1.xpose.msra.mxu0 0.0
    %1256 = vmatprep.subr.mxu0 0.0
    %1257 = vmatpush1.xpose.msra.mxu0 0.0
    %1258 = vmatprep.subr.mxu0 0.0
    %1259 = vmatpush1.xpose.msra.mxu0 0.0
    %1260 = vmatprep.subr.mxu0 0.0
    %1261 = vmatpush1.xpose.msra.mxu0 0.0
    %1262 = vmatprep.subr.mxu0 0.0
    %1263 = vmatpush1.xpose.msra.mxu0 0.0
    %1264 = vmatprep.subr.mxu0 0.0
    %1265 = vmatpush1.xpose.msra.mxu0 0.0
    %1266 = vmatprep.subr.mxu0 0.0
    %1267 = vmatpush1.xpose.msra.mxu0 0.0
    %1268 = vmatprep.subr.mxu0 0.0
    %1269 = vmatpush1.xpose.msra.mxu0 0.0
    %1270 = vmatprep.subr.mxu0 0.0
    %1271 = vmatpush1.xpose.msra.mxu0 0.0
    %1272 = vmatprep.subr.mxu0 0.0
    %1273 = vmatpush1.xpose.msra.mxu0 0.0
    %1274 = vmatprep.subr.mxu0 0.0
    %1275 = vmatpush1.xpose.msra.mxu0 0.0
    %1276 = vmatprep.subr.mxu0 0.0
    %1277 = vmatpush1.xpose.msra.mxu0 0.0
    %1278 = vmatprep.subr.mxu0 0.0
    %1279 = vmatpush1.xpose.msra.mxu0 0.0
    %1280 = vmatprep.subr.mxu0 0.0
    %1281 = vmatpush1.xpose.msra.mxu0 0.0
    %1282 = vmatprep.subr.mxu0 0.0
    %1283 = vmatpush1.xpose.msra.mxu0 0.0
    %1284 = vmatprep.mubr.f32.mxu0 0.0
    %1285 = vmatmul.mubr.f32.gmra.mrb[0].mxu0 %v1216
    %v1286 = vpop.f32.mrb[0].mxu0
    %v1287 = vadd.f32 0.0, %v1286
    %v1288 = vpop.f32.mrb[0].mxu0
    %1289 = vdwg.mxu0
    %v1290 = vsel %vm148, %v1209, -inf
    %1291 = vmax.xlane.f32.xlu0 %v1290
    %v1292 = vpop.xlane.xlu0 %1291
    %v1293 = vsel %vm148, %v1287, -inf
    %1294 = vmax.xlane.f32.xlu0 %v1293
    %v1295 = vpop.xlane.xlu0 %1294
    %v1296 = vsub.f32 %v1209, %v1292
    %v1297 = vsub.f32 %v1287, %v1295
    %v1298 = vmul.f32 %v1296, 1.442695
    %v1299 = vpow.pop %v1298
    %v1300 = vmul.f32 %v1297, 1.442695
    %v1301 = vpow.pop %v1300
    %v1302 = vsel %vm148, %v1299, 0.0
    %1303 = vadd.xlane.f32.xlu0 %v1302
    %v1304 = vpop.xlane.xlu0 %1303
    %v1305 = vsel %vm148, %v1301, 0.0
    %1306 = vadd.xlane.f32.xlu0 %v1305
    %v1307 = vpop.xlane.xlu0 %1306
    %v1308 = vrcp.pop %v1304
    %v1309 = vmul.f32 %v1299, %v1308
    %v1310 = vrcp.pop %v1307
    %v1311 = vmul.f32 %v1301, %v1310
    %1312 = vrot.lane.b32.xlu0 %v137, 40
    %v1313 = vpop.permute.xlu0 %1312
    %v1316 = vsel %vm148, %v1309, 0
    %1318 = vmatprep.subr.mxu0 0.0
    %1319 = vmatpush1.msra.mxu0 %v1313
    %1320 = vmatprep.subr.mxu0 0.0
    %1321 = vmatpush1.msra.mxu0 0.0
    %1322 = vmatprep.subr.mxu0 0.0
    %1323 = vmatpush1.msra.mxu0 0.0
    %1324 = vmatprep.subr.mxu0 0.0
    %1325 = vmatpush1.msra.mxu0 0.0
    %1326 = vmatprep.subr.mxu0 0.0
    %1327 = vmatpush1.msra.mxu0 0.0
    %1328 = vmatprep.subr.mxu0 0.0
    %1329 = vmatpush1.msra.mxu0 0.0
    %1330 = vmatprep.subr.mxu0 0.0
    %1331 = vmatpush1.msra.mxu0 0.0
    %1332 = vmatprep.subr.mxu0 0.0
    %1333 = vmatpush1.msra.mxu0 0.0
    %1334 = vmatprep.subr.mxu0 0.0
    %1335 = vmatpush1.msra.mxu0 0.0
    %1336 = vmatprep.subr.mxu0 0.0
    %1337 = vmatpush1.msra.mxu0 0.0
    %1338 = vmatprep.subr.mxu0 0.0
    %1339 = vmatpush1.msra.mxu0 0.0
    %1340 = vmatprep.subr.mxu0 0.0
    %1341 = vmatpush1.msra.mxu0 0.0
    %1342 = vmatprep.subr.mxu0 0.0
    %1343 = vmatpush1.msra.mxu0 0.0
    %1344 = vmatprep.subr.mxu0 0.0
    %1345 = vmatpush1.msra.mxu0 0.0
    %1346 = vmatprep.subr.mxu0 0.0
    %1347 = vmatpush1.msra.mxu0 0.0
    %1348 = vmatprep.subr.mxu0 0.0
    %1349 = vmatpush1.msra.mxu0 0.0
    %1350 = vmatprep.subr.mxu0 0.0
    %1351 = vmatpush1.msra.mxu0 0.0
    %1352 = vmatprep.subr.mxu0 0.0
    %1353 = vmatpush1.msra.mxu0 0.0
    %1354 = vmatprep.subr.mxu0 0.0
    %1355 = vmatpush1.msra.mxu0 0.0
    %1356 = vmatprep.subr.mxu0 0.0
    %1357 = vmatpush1.msra.mxu0 0.0
    %1358 = vmatprep.subr.mxu0 0.0
    %1359 = vmatpush1.msra.mxu0 0.0
    %1360 = vmatprep.subr.mxu0 0.0
    %1361 = vmatpush1.msra.mxu0 0.0
    %1362 = vmatprep.subr.mxu0 0.0
    %1363 = vmatpush1.msra.mxu0 0.0
    %1364 = vmatprep.subr.mxu0 0.0
    %1365 = vmatpush1.msra.mxu0 0.0
    %1366 = vmatprep.subr.mxu0 0.0
    %1367 = vmatpush1.msra.mxu0 0.0
    %1368 = vmatprep.subr.mxu0 0.0
    %1369 = vmatpush1.msra.mxu0 0.0
    %1370 = vmatprep.subr.mxu0 0.0
    %1371 = vmatpush1.msra.mxu0 0.0
    %1372 = vmatprep.subr.mxu0 0.0
    %1373 = vmatpush1.msra.mxu0 0.0
    %1374 = vmatprep.subr.mxu0 0.0
    %1375 = vmatpush1.msra.mxu0 0.0
    %1376 = vmatprep.subr.mxu0 0.0
    %1377 = vmatpush1.msra.mxu0 0.0
    %1378 = vmatprep.subr.mxu0 0.0
    %1379 = vmatpush1.msra.mxu0 0.0
    %1380 = vmatprep.subr.mxu0 0.0
    %1381 = vmatpush1.msra.mxu0 0.0
    %1382 = vmatprep.mubr.f32.mxu0 0.0
    %1383 = vmatmul.mubr.f32.gmra.mrb[0].mxu0 %v1316
    %v1384 = vpop.f32.mrb[0].mxu0
    %v1385 = vadd.f32 0.0, %v1384
    %v1386 = vpop.f32.mrb[0].mxu0
    %1387 = vdwg.mxu0
    %1388 = vrot.lane.b32.xlu0 %v142, 40
    %v1389 = vpop.permute.xlu0 %1388
    %v1392 = vsel %vm148, %v1311, 0
    %1394 = vmatprep.subr.mxu0 0.0
    %1395 = vmatpush1.msra.mxu0 %v1389
    %1396 = vmatprep.subr.mxu0 0.0
    %1397 = vmatpush1.msra.mxu0 0.0
    %1398 = vmatprep.subr.mxu0 0.0
    %1399 = vmatpush1.msra.mxu0 0.0
    %1400 = vmatprep.subr.mxu0 0.0
    %1401 = vmatpush1.msra.mxu0 0.0
    %1402 = vmatprep.subr.mxu0 0.0
    %1403 = vmatpush1.msra.mxu0 0.0
    %1404 = vmatprep.subr.mxu0 0.0
    %1405 = vmatpush1.msra.mxu0 0.0
    %1406 = vmatprep.subr.mxu0 0.0
    %1407 = vmatpush1.msra.mxu0 0.0
    %1408 = vmatprep.subr.mxu0 0.0
    %1409 = vmatpush1.msra.mxu0 0.0
    %1410 = vmatprep.subr.mxu0 0.0
    %1411 = vmatpush1.msra.mxu0 0.0
    %1412 = vmatprep.subr.mxu0 0.0
    %1413 = vmatpush1.msra.mxu0 0.0
    %1414 = vmatprep.subr.mxu0 0.0
    %1415 = vmatpush1.msra.mxu0 0.0
    %1416 = vmatprep.subr.mxu0 0.0
    %1417 = vmatpush1.msra.mxu0 0.0
    %1418 = vmatprep.subr.mxu0 0.0
    %1419 = vmatpush1.msra.mxu0 0.0
    %1420 = vmatprep.subr.mxu0 0.0
    %1421 = vmatpush1.msra.mxu0 0.0
    %1422 = vmatprep.subr.mxu0 0.0
    %1423 = vmatpush1.msra.mxu0 0.0
    %1424 = vmatprep.subr.mxu0 0.0
    %1425 = vmatpush1.msra.mxu0 0.0
    %1426 = vmatprep.subr.mxu0 0.0
    %1427 = vmatpush1.msra.mxu0 0.0
    %1428 = vmatprep.subr.mxu0 0.0
    %1429 = vmatpush1.msra.mxu0 0.0
    %1430 = vmatprep.subr.mxu0 0.0
    %1431 = vmatpush1.msra.mxu0 0.0
    %1432 = vmatprep.subr.mxu0 0.0
    %1433 = vmatpush1.msra.mxu0 0.0
    %1434 = vmatprep.subr.mxu0 0.0
    %1435 = vmatpush1.msra.mxu0 0.0
    %1436 = vmatprep.subr.mxu0 0.0
    %1437 = vmatpush1.msra.mxu0 0.0
    %1438 = vmatprep.subr.mxu0 0.0
    %1439 = vmatpush1.msra.mxu0 0.0
    %1440 = vmatprep.subr.mxu0 0.0
    %1441 = vmatpush1.msra.mxu0 0.0
    %1442 = vmatprep.subr.mxu0 0.0
    %1443 = vmatpush1.msra.mxu0 0.0
    %1444 = vmatprep.subr.mxu0 0.0
    %1445 = vmatpush1.msra.mxu0 0.0
    %1446 = vmatprep.subr.mxu0 0.0
    %1447 = vmatpush1.msra.mxu0 0.0
    %1448 = vmatprep.subr.mxu0 0.0
    %1449 = vmatpush1.msra.mxu0 0.0
    %1450 = vmatprep.subr.mxu0 0.0
    %1451 = vmatpush1.msra.mxu0 0.0
    %1452 = vmatprep.subr.mxu0 0.0
    %1453 = vmatpush1.msra.mxu0 0.0
    %1454 = vmatprep.subr.mxu0 0.0
    %1455 = vmatpush1.msra.mxu0 0.0
    %1456 = vmatprep.subr.mxu0 0.0
    %1457 = vmatpush1.msra.mxu0 0.0
    %1458 = vmatprep.mubr.f32.mxu0 0.0
    %1459 = vmatmul.mubr.f32.gmra.mrb[0].mxu0 %v1392
    %v1460 = vpop.f32.mrb[0].mxu0
    %v1461 = vadd.f32 0.0, %v1460
    %v1462 = vpop.f32.mrb[0].mxu0
    %1463 = vdwg.mxu0
    %1466 = vrot.lane.b32.xlu0 %v725, 8
    %v1467 = vpop.permute.xlu0 %1466
    %1468 = vrot.lane.b32.xlu0 %v801, 8
    %v1469 = vpop.permute.xlu0 %1468
    %1474 = vrot.lane.b32.xlu0 %v1055, 16
    %v1475 = vpop.permute.xlu0 %1474
    %1476 = vrot.lane.b32.xlu0 %v1131, 16
    %v1477 = vpop.permute.xlu0 %1476
    %1482 = vrot.lane.b32.xlu0 %v1385, 24
    %v1483 = vpop.permute.xlu0 %1482
    %1484 = vrot.lane.b32.xlu0 %v1461, 24
    %v1485 = vpop.permute.xlu0 %1484
    %v1488 = vsel %vm148, %v395, %v1467
    %v1489 = vsel %vm148, %v471, %v1469
    %vm1490 = vcmask 130048
    %v1491 = vsel %vm1490, %v1488, %v1475
    %v1492 = vsel %vm1490, %v1489, %v1477
    %vm1493 = vcmask 195584
    %v1494 = vsel %vm1493, %v1491, %v1483
    %v1495 = vsel %vm1493, %v1492, %v1485
    %v1496 = vlaneseq
    %v1497 = vshrl.u32 %v1496, 7
    %v1498 = vsub.s32 1, %v1497
    %v1499 = vrot.slane %v58, %v1498
    %v1501 = vsel %vm63, %v1494, 0
    %v1504 = vsel %vm63, %v1495, 0
    %1506 = vmatprep.subr.mxu0 0.0
    %1507 = vmatpush1.msra.mxu0 %v46
    %1508 = vmatprep.subr.mxu0 0.0
    %1509 = vmatpush1.msra.mxu0 %v47
    %1510 = vmatprep.subr.mxu0 0.0
    %1511 = vmatpush1.msra.mxu0 %v48
    %1512 = vmatprep.subr.mxu0 0.0
    %1513 = vmatpush1.msra.mxu0 %v49
    %1514 = vmatprep.subr.mxu0 0.0
    %1515 = vmatpush1.msra.mxu0 0.0
    %1516 = vmatprep.subr.mxu0 0.0
    %1517 = vmatpush1.msra.mxu0 0.0
    %1518 = vmatprep.subr.mxu0 0.0
    %1519 = vmatpush1.msra.mxu0 0.0
    %1520 = vmatprep.subr.mxu0 0.0
    %1521 = vmatpush1.msra.mxu0 0.0
    %1522 = vmatprep.subr.mxu0 0.0
    %1523 = vmatpush1.msra.mxu0 0.0
    %1524 = vmatprep.subr.mxu0 0.0
    %1525 = vmatpush1.msra.mxu0 0.0
    %1526 = vmatprep.subr.mxu0 0.0
    %1527 = vmatpush1.msra.mxu0 0.0
    %1528 = vmatprep.subr.mxu0 0.0
    %1529 = vmatpush1.msra.mxu0 0.0
    %1530 = vmatprep.subr.mxu0 0.0
    %1531 = vmatpush1.msra.mxu0 0.0
    %1532 = vmatprep.subr.mxu0 0.0
    %1533 = vmatpush1.msra.mxu0 0.0
    %1534 = vmatprep.subr.mxu0 0.0
    %1535 = vmatpush1.msra.mxu0 0.0
    %1536 = vmatprep.subr.mxu0 0.0
    %1537 = vmatpush1.msra.mxu0 0.0
    %1538 = vmatprep.subr.mxu0 0.0
    %1539 = vmatpush1.msra.mxu0 0.0
    %1540 = vmatprep.subr.mxu0 0.0
    %1541 = vmatpush1.msra.mxu0 0.0
    %1542 = vmatprep.subr.mxu0 0.0
    %1543 = vmatpush1.msra.mxu0 0.0
    %1544 = vmatprep.subr.mxu0 0.0
    %1545 = vmatpush1.msra.mxu0 0.0
    %1546 = vmatprep.subr.mxu0 0.0
    %1547 = vmatpush1.msra.mxu0 0.0
    %1548 = vmatprep.subr.mxu0 0.0
    %1549 = vmatpush1.msra.mxu0 0.0
    %1550 = vmatprep.subr.mxu0 0.0
    %1551 = vmatpush1.msra.mxu0 0.0
    %1552 = vmatprep.subr.mxu0 0.0
    %1553 = vmatpush1.msra.mxu0 0.0
    %1554 = vmatprep.subr.mxu0 0.0
    %1555 = vmatpush1.msra.mxu0 0.0
    %1556 = vmatprep.subr.mxu0 0.0
    %1557 = vmatpush1.msra.mxu0 0.0
    %1558 = vmatprep.subr.mxu0 0.0
    %1559 = vmatpush1.msra.mxu0 0.0
    %1560 = vmatprep.subr.mxu0 0.0
    %1561 = vmatpush1.msra.mxu0 0.0
    %1562 = vmatprep.subr.mxu0 0.0
    %1563 = vmatpush1.msra.mxu0 0.0
    %1564 = vmatprep.subr.mxu0 0.0
    %1565 = vmatpush1.msra.mxu0 0.0
    %1566 = vmatprep.subr.mxu0 0.0
    %1567 = vmatpush1.msra.mxu0 0.0
    %1568 = vmatprep.subr.mxu0 0.0
    %1569 = vmatpush1.msra.mxu0 0.0
    %1570 = vmatprep.mubr.f32.mxu0 0.0
    %1571 = vmatmul.mubr.f32.gmra.mrb[0].mxu0 %v1501
    %v1572 = vpop.f32.mrb[0].mxu0
    %v1573 = vadd.f32 %v1499, %v1572
    %v1574 = vpop.f32.mrb[0].mxu0
    %1575 = vmatprep.mubr.f32.mxu0 0.0
    %1576 = vmatmul.mubr.f32.gmra.mrb[0].mxu0 %v1504
    %v1577 = vpop.f32.mrb[0].mxu0
    %v1578 = vadd.f32 %v1499, %v1577
    %v1579 = vpop.f32.mrb[0].mxu0
    %1580 = vdwg.mxu0
    %v1581 = vadd.f32 %v40, %v1573
    %v1582 = vadd.f32 %v41, %v1578
    %v1583 = vsel %vm63, %v1581, 0.0
    %1584 = vadd.xlane.f32.xlu0 %v1583
    %v1585 = vpop.xlane.xlu0 %1584
    %v1586 = vsel %vm63, %v1582, 0.0
    %1587 = vadd.xlane.f32.xlu0 %v1586
    %v1588 = vpop.xlane.xlu0 %1587
    %v1589 = vrcp.pop 32.0
    %v1590 = vmul.f32 %v1585, %v1589
    %v1591 = vmul.f32 %v1588, %v1589
    %v1592 = vsub.f32 %v1581, %v1590
    %v1593 = vsub.f32 %v1582, %v1591
    %v1594 = vmul.f32 %v1592, %v1592
    %v1595 = vmul.f32 %v1593, %v1593
    %v1596 = vsel %vm63, %v1594, 0.0
    %1597 = vadd.xlane.f32.xlu0 %v1596
    %v1598 = vpop.xlane.xlu0 %1597
    %v1599 = vsel %vm63, %v1595, 0.0
    %1600 = vadd.xlane.f32.xlu0 %v1599
    %v1601 = vpop.xlane.xlu0 %1600
    %v1602 = vmul.f32 %v1598, %v1589
    %v1603 = vmul.f32 %v1601, %v1589
    %v1604 = vadd.f32 %v1602, 1e-05
    %v1605 = vadd.f32 %v1603, 1e-05
    %v1606 = vrsqrt.pop %v1604
    %v1607 = vrsqrt.pop %v1605
    %v1608 = vmul.f32 %v1592, %v1606
    %v1609 = vmul.f32 %v1593, %v1607
    %v1610 = vlaneseq
    %v1611 = vshrl.u32 %v1610, 7
    %v1612 = vsub.s32 2, %v1611
    %v1613 = vrot.slane %v58, %v1612
    %v1614 = vmul.f32 %v1608, %v1613
    %v1615 = vmul.f32 %v1609, %v1613
    %v1616 = vlaneseq
    %v1617 = vshrl.u32 %v1616, 7
    %v1618 = vsub.s32 3, %v1617
    %v1619 = vrot.slane %v58, %v1618
    %v1620 = vadd.f32 %v1614, %v1619
    %v1621 = vadd.f32 %v1615, %v1619
    %v1622 = vlaneseq
    %v1623 = vshrl.u32 %v1622, 7
    %v1624 = vsub.s32 6, %v1623
    %v1625 = vrot.slane %v58, %v1624
    %v1627 = vsel %vm63, %v1620, 0
    %v1630 = vsel %vm63, %v1621, 0
    %1632 = vmatprep.subr.mxu0 0.0
    %1633 = vmatpush1.msra.mxu0 %v50
    %1634 = vmatprep.subr.mxu0 0.0
    %1635 = vmatpush1.msra.mxu0 %v51
    %1636 = vmatprep.subr.mxu0 0.0
    %1637 = vmatpush1.msra.mxu0 %v52
    %1638 = vmatprep.subr.mxu0 0.0
    %1639 = vmatpush1.msra.mxu0 %v53
    %1640 = vmatprep.subr.mxu0 0.0
    %1641 = vmatpush1.msra.mxu0 0.0
    %1642 = vmatprep.subr.mxu0 0.0
    %1643 = vmatpush1.msra.mxu0 0.0
    %1644 = vmatprep.subr.mxu0 0.0
    %1645 = vmatpush1.msra.mxu0 0.0
    %1646 = vmatprep.subr.mxu0 0.0
    %1647 = vmatpush1.msra.mxu0 0.0
    %1648 = vmatprep.subr.mxu0 0.0
    %1649 = vmatpush1.msra.mxu0 0.0
    %1650 = vmatprep.subr.mxu0 0.0
    %1651 = vmatpush1.msra.mxu0 0.0
    %1652 = vmatprep.subr.mxu0 0.0
    %1653 = vmatpush1.msra.mxu0 0.0
    %1654 = vmatprep.subr.mxu0 0.0
    %1655 = vmatpush1.msra.mxu0 0.0
    %1656 = vmatprep.subr.mxu0 0.0
    %1657 = vmatpush1.msra.mxu0 0.0
    %1658 = vmatprep.subr.mxu0 0.0
    %1659 = vmatpush1.msra.mxu0 0.0
    %1660 = vmatprep.subr.mxu0 0.0
    %1661 = vmatpush1.msra.mxu0 0.0
    %1662 = vmatprep.subr.mxu0 0.0
    %1663 = vmatpush1.msra.mxu0 0.0
    %1664 = vmatprep.subr.mxu0 0.0
    %1665 = vmatpush1.msra.mxu0 0.0
    %1666 = vmatprep.subr.mxu0 0.0
    %1667 = vmatpush1.msra.mxu0 0.0
    %1668 = vmatprep.subr.mxu0 0.0
    %1669 = vmatpush1.msra.mxu0 0.0
    %1670 = vmatprep.subr.mxu0 0.0
    %1671 = vmatpush1.msra.mxu0 0.0
    %1672 = vmatprep.subr.mxu0 0.0
    %1673 = vmatpush1.msra.mxu0 0.0
    %1674 = vmatprep.subr.mxu0 0.0
    %1675 = vmatpush1.msra.mxu0 0.0
    %1676 = vmatprep.subr.mxu0 0.0
    %1677 = vmatpush1.msra.mxu0 0.0
    %1678 = vmatprep.subr.mxu0 0.0
    %1679 = vmatpush1.msra.mxu0 0.0
    %1680 = vmatprep.subr.mxu0 0.0
    %1681 = vmatpush1.msra.mxu0 0.0
    %1682 = vmatprep.subr.mxu0 0.0
    %1683 = vmatpush1.msra.mxu0 0.0
    %1684 = vmatprep.subr.mxu0 0.0
    %1685 = vmatpush1.msra.mxu0 0.0
    %1686 = vmatprep.subr.mxu0 0.0
    %1687 = vmatpush1.msra.mxu0 0.0
    %1688 = vmatprep.subr.mxu0 0.0
    %1689 = vmatpush1.msra.mxu0 0.0
    %1690 = vmatprep.subr.mxu0 0.0
    %1691 = vmatpush1.msra.mxu0 0.0
    %1692 = vmatprep.subr.mxu0 0.0
    %1693 = vmatpush1.msra.mxu0 0.0
    %1694 = vmatprep.subr.mxu0 0.0
    %1695 = vmatpush1.msra.mxu0 0.0
    %1696 = vmatprep.mubr.f32.mxu0 0.0
    %1697 = vmatmul.mubr.f32.gmra.mrb[0].mxu0 %v1627
    %v1698 = vpop.f32.mrb[0].mxu0
    %v1699 = vadd.f32 %v1625, %v1698
    %v1700 = vpop.f32.mrb[0].mxu0
    %1701 = vmatprep.mubr.f32.mxu0 0.0
    %1702 = vmatmul.mubr.f32.gmra.mrb[0].mxu0 %v1630
    %v1703 = vpop.f32.mrb[0].mxu0
    %v1704 = vadd.f32 %v1625, %v1703
    %v1705 = vpop.f32.mrb[0].mxu0
    %1706 = vdwg.mxu0
    %v1707 = vmax.f32 %v1699, 0.0
    %v1708 = vmax.f32 %v1704, 0.0
    %v1709 = vlaneseq
    %v1710 = vshrl.u32 %v1709, 7
    %v1711 = vsub.s32 7, %v1710
    %v1712 = vrot.slane %v58, %v1711
    %1713 = vmatprep.subr.mxu0 0.0
    %1714 = vmatpush1.xpose.msra.mxu0 %v54
    %1715 = vmatprep.subr.mxu0 0.0
    %1716 = vmatpush1.xpose.msra.mxu0 %v55
    %1717 = vmatprep.subr.mxu0 0.0
    %1718 = vmatpush1.xpose.msra.mxu0 %v56
    %1719 = vmatprep.subr.mxu0 0.0
    %1720 = vmatpush1.xpose.msra.mxu0 %v57
    %1721 = vmatprep.subr.mxu0 0.0
    %1722 = vmatpush1.xpose.msra.mxu0 0.0
    %1723 = vmatprep.subr.mxu0 0.0
    %1724 = vmatpush1.xpose.msra.mxu0 0.0
    %1725 = vmatprep.subr.mxu0 0.0
    %1726 = vmatpush1.xpose.msra.mxu0 0.0
    %1727 = vmatprep.subr.mxu0 0.0
    %1728 = vmatpush1.xpose.msra.mxu0 0.0
    %1729 = vmatprep.subr.mxu0 0.0
    %1730 = vmatpush1.xpose.msra.mxu0 0.0
    %1731 = vmatprep.subr.mxu0 0.0
    %1732 = vmatpush1.xpose.msra.mxu0 0.0
    %1733 = vmatprep.subr.mxu0 0.0
    %1734 = vmatpush1.xpose.msra.mxu0 0.0
    %1735 = vmatprep.subr.mxu0 0.0
    %1736 = vmatpush1.xpose.msra.mxu0 0.0
    %1737 = vmatprep.subr.mxu0 0.0
    %1738 = vmatpush1.xpose.msra.mxu0 0.0
    %1739 = vmatprep.subr.mxu0 0.0
    %1740 = vmatpush1.xpose.msra.mxu0 0.0
    %1741 = vmatprep.subr.mxu0 0.0
    %1742 = vmatpush1.xpose.msra.mxu0 0.0
    %1743 = vmatprep.subr.mxu0 0.0
    %1744 = vmatpush1.xpose.msra.mxu0 0.0
    %1745 = vmatprep.subr.mxu0 0.0
    %1746 = vmatpush1.xpose.msra.mxu0 0.0
    %1747 = vmatprep.subr.mxu0 0.0
    %1748 = vmatpush1.xpose.msra.mxu0 0.0
    %1749 = vmatprep.subr.mxu0 0.0
    %1750 = vmatpush1.xpose.msra.mxu0 0.0
    %1751 = vmatprep.subr.mxu0 0.0
    %1752 = vmatpush1.xpose.msra.mxu0 0.0
    %1753 = vmatprep.subr.mxu0 0.0
    %1754 = vmatpush1.xpose.msra.mxu0 0.0
    %1755 = vmatprep.subr.mxu0 0.0
    %1756 = vmatpush1.xpose.msra.mxu0 0.0
    %1757 = vmatprep.subr.mxu0 0.0
    %1758 = vmatpush1.xpose.msra.mxu0 0.0
    %1759 = vmatprep.subr.mxu0 0.0
    %1760 = vmatpush1.xpose.msra.mxu0 0.0
    %1761 = vmatprep.subr.mxu0 0.0
    %1762 = vmatpush1.xpose.msra.mxu0 0.0
    %1763 = vmatprep.subr.mxu0 0.0
    %1764 = vmatpush1.xpose.msra.mxu0 0.0
    %1765 = vmatprep.subr.mxu0 0.0
    %1766 = vmatpush1.xpose.msra.mxu0 0.0
    %1767 = vmatprep.subr.mxu0 0.0
    %1768 = vmatpush1.xpose.msra.mxu0 0.0
    %1769 = vmatprep.subr.mxu0 0.0
    %1770 = vmatpush1.xpose.msra.mxu0 0.0
    %1771 = vmatprep.subr.mxu0 0.0
    %1772 = vmatpush1.xpose.msra.mxu0 0.0
    %1773 = vmatprep.subr.mxu0 0.0
    %1774 = vmatpush1.xpose.msra.mxu0 0.0
    %1775 = vmatprep.subr.mxu0 0.0
    %1776 = vmatpush1.xpose.msra.mxu0 0.0
    %1777 = vmatprep.mubr.f32.mxu0 0.0
    %1778 = vmatmul.mubr.f32.gmra.mrb[0].mxu0 %v1707
    %v1779 = vpop.f32.mrb[0].mxu0
    %v1780 = vadd.f32 %v1712, %v1779
    %v1781 = vpop.f32.mrb[0].mxu0
    %1782 = vmatprep.mubr.f32.mxu0 0.0
    %1783 = vmatmul.mubr.f32.gmra.mrb[0].mxu0 %v1708
    %v1784 = vpop.f32.mrb[0].mxu0
    %v1785 = vadd.f32 %v1712, %v1784
    %v1786 = vpop.f32.mrb[0].mxu0
    %1787 = vdwg.mxu0
    %v1788 = vadd.f32 %v1620, %v1780
    %v1789 = vadd.f32 %v1621, %v1785
    %v1790 = vsel %vm63, %v1788, 0.0
    %1791 = vadd.xlane.f32.xlu0 %v1790
    %v1792 = vpop.xlane.xlu0 %1791
    %v1793 = vsel %vm63, %v1789, 0.0
    %1794 = vadd.xlane.f32.xlu0 %v1793
    %v1795 = vpop.xlane.xlu0 %1794
    %v1796 = vmul.f32 %v1792, %v1589
    %v1797 = vmul.f32 %v1795, %v1589
    %v1798 = vsub.f32 %v1788, %v1796
    %v1799 = vsub.f32 %v1789, %v1797
    %v1800 = vmul.f32 %v1798, %v1798
    %v1801 = vmul.f32 %v1799, %v1799
    %v1802 = vsel %vm63, %v1800, 0.0
    %1803 = vadd.xlane.f32.xlu0 %v1802
    %v1804 = vpop.xlane.xlu0 %1803
    %v1805 = vsel %vm63, %v1801, 0.0
    %1806 = vadd.xlane.f32.xlu0 %v1805
    %v1807 = vpop.xlane.xlu0 %1806
    %v1808 = vmul.f32 %v1804, %v1589
    %v1809 = vmul.f32 %v1807, %v1589
    %v1810 = vadd.f32 %v1808, 1e-05
    %v1811 = vadd.f32 %v1809, 1e-05
    %v1812 = vrsqrt.pop %v1810
    %v1813 = vrsqrt.pop %v1811
    %v1814 = vmul.f32 %v1798, %v1812
    %v1815 = vmul.f32 %v1799, %v1813
    %v1816 = vlaneseq
    %v1817 = vshrl.u32 %v1816, 7
    %v1818 = vsub.s32 4, %v1817
    %v1819 = vrot.slane %v58, %v1818
    %v1820 = vmul.f32 %v1814, %v1819
    %v1821 = vmul.f32 %v1815, %v1819
    %v1822 = vlaneseq
    %v1823 = vshrl.u32 %v1822, 7
    %v1824 = vsub.s32 5, %v1823
    %v1825 = vrot.slane %v58, %v1824
    %v1826 = vadd.f32 %v1820, %v1825
    %v1827 = vadd.f32 %v1821, %v1825
    %1828 = vst.msk [vmem:[#allocation7] sm:$0xff] %vm63, %v1826
    %1829 = vst.msk [vmem:[#allocation7 + $0x8] sm:$0xff] %vm63, %v1827
    // Predicated region
    $region18: #{tpu_custom_call.1} parent=1 // pred_check
      _
    $region19: #{tpu_custom_call.1} parent=1 // pred_check_branch
      %1831 = sbr.rel (0) target = $region21
    $region20: #{tpu_custom_call.1} parent=1 // pred_region
      %s1833 = ssub.s32 256, 256
      %1834 = vsyncadd [#allocation4], %s1833
      %s1835 = sshll.u32 [#allocation7], 4
      %s1836 = int_to_ptr.vmem [resolvable:$true] %s1835
      %1841 = dma.vmem_to_hbm [thread:$0]  %s1836, 256, %s2, [#allocation4], 128, 128, 8
    $region21: #{tpu_custom_call.1} parent=1 // pred_fallthru
      _
    // Predicated region
    $region22: #{tpu_custom_call.1} parent=1 // pred_check
      _
    $region23: #{tpu_custom_call.1} parent=1 // pred_check_branch
      %1843 = sbr.rel (0) target = $region25
    $region24: #{tpu_custom_call.1} parent=1 // pred_region
      %1844 = dma.done [#allocation4], 256
    $region25: #{tpu_custom_call.1} parent=1 // pred_fallthru
      _
    %1845 = vsyncpa [#allocation3], 1
    %1846 = vsyncpa [#allocation6], 1
    %1847 = vsyncpa [#allocation4], 1

</llo_original>
